<compile_context>
chip_gen: v7x
topology: tpu7x:2x2x1
jax: 0.10.0
libtpu: 0.0.40
codegen_flags: <defaults>
</compile_context>

<pallas_src>
import functools

import jax
import jax.numpy as jnp
import numpy as np
from jax.experimental import pallas as pl
from jax.experimental.pallas import tpu as pltpu


def _round_up(x, m):
    return ((x + m - 1) // m) * m


def _sigmoid(x):
    # sigmoid via tanh keeps the divide off the VALU (tanh runs on the EUP)
    # while staying f32-accurate.
    return 0.5 * (jnp.tanh(0.5 * x) + 1.0)


def _convgru_kernel(xp_ref, hp_ref, w_x_ref, w_h_ref, w_hr_ref,
                    b_zr_ref, b_f_ref, out_ref, hr_ref, *, Wp, M, F):
    """One batch element of the ConvGRU cell (both 3x3 convs + gating).

    Refs are channels-on-sublanes, padded-flattened-spatial-on-lanes:
      xp_ref (Cip, Lpad), hp_ref (Cop, Lpad), hr_ref scratch (Cop, Lpad),
      out_ref (Cop, M) with M = Mout a multiple of 128 (junk tail + per-row
      pad columns included, dropped in the wrapper).
    """
    Co = out_ref.shape[0]
    Lpad = hp_ref.shape[1]

    def im2col(ref):
        # (9*C, M) slab: rows [k*C, (k+1)*C) hold conv tap k = dy*3 + dx,
        # i.e. the padded input shifted by (dy-1, dx-1).  All offsets static.
        taps = []
        for dy in range(3):
            for dx in range(3):
                off = F + (dy - 1) * Wp + (dx - 1)
                taps.append(ref[:, off:off + M])
        return jnp.concatenate(taps, axis=0)

    xcol = im2col(xp_ref)                                    # (9*Cip, M)
    hcol = im2col(hp_ref)                                    # (9*Cop, M)

    # conv_rz / conv_f contributions — one MXU matmul per input part.
    zrf_x = jnp.dot(w_x_ref[...], xcol,
                    preferred_element_type=jnp.float32)      # (3*Cop, M)
    zr_h = jnp.dot(w_h_ref[...], hcol,
                   preferred_element_type=jnp.float32)       # (2*Cop, M)

    zr = zrf_x[:2 * Co] + zr_h + b_zr_ref[...]               # (2*Cop, M)
    gates = _sigmoid(zr)
    update_gate = gates[:Co]                                 # z
    reset_gate = gates[Co:]                                  # r

    h_prev = hp_ref[:, F:F + M]                              # (Cop, M)

    # prev_h * reset into the padded scratch.  Per-row image pad columns
    # inside [F, F+M) are already zero (h_prev is zero there); only the
    # front/back strips (top/bottom pad rows) need explicit zeros so the hr
    # taps read zeros.  Done every step: tiny and megacore-safe.
    hr_ref[:, :F] = jnp.zeros((Co, F), jnp.float32)
    hr_ref[:, F + M:] = jnp.zeros((Co, Lpad - F - M), jnp.float32)
    hr_ref[:, F:F + M] = h_prev * reset_gate

    hrcol = im2col(hr_ref)                                   # (9*Cop, M)
    f = zrf_x[2 * Co:] + jnp.dot(w_hr_ref[...], hrcol,
                                 preferred_element_type=jnp.float32)
    f = f + b_f_ref[...]
    input_gate = jnp.tanh(f)

    # (1 - z) * h + z * tanh(f)
    out_ref[...] = h_prev + update_gate * (input_gate - h_prev)


def conv_gru_cell(x_nchw, h_nchw, params):
    """One ConvGRUCell step.  x: (B, Ci, H, W), prev_h: (B, Co, H, W) -> new h."""
    B, Ci, H, W = x_nchw.shape
    Co = h_nchw.shape[1]
    Cip = _round_up(Ci, 8)                        # sublane-aligned channel counts
    Cop = _round_up(Co, 8)
    Hp, Wp = H + 2, W + 2
    M = H * Wp                                    # interior rows incl. pad cols
    Mout = _round_up(M, 128)                      # lane-dense output width
    F = _round_up(Wp + 1, 128)                    # lane-aligned interior start
    Lpad = _round_up(F + Mout + Wp + 1, 128)      # covers all tap reads

    def pad_flat(a, cpad):
        # NCHW -> channel pad -> spatial zero-pad -> flattened on the lane axis.
        a = jnp.pad(a.astype(jnp.float32),
                    ((0, 0), (0, cpad - a.shape[1]), (1, 1), (1, 1)))
        a = a.reshape(a.shape[0], a.shape[1], Hp * Wp)
        return jnp.pad(a, ((0, 0), (0, 0),
                           (F - Wp, Lpad - (F - Wp) - Hp * Wp)))

    x_pad = pad_flat(x_nchw, Cip)                 # (B, Cip, Lpad)
    h_pad = pad_flat(h_nchw, Cop)                 # (B, Cop, Lpad)

    def fold(w, cinp):                            # (3,3,Cin,Co) -> (Cop, 9*cinp)
        w = jnp.pad(w.astype(jnp.float32),
                    ((0, 0), (0, 0),
                     (0, cinp - w.shape[2]), (0, Cop - w.shape[3])))
        return w.reshape(9 * cinp, Cop).T

    def pad_b(b):                                 # (1, Co) -> (1, Cop)
        return jnp.pad(b.astype(jnp.float32), ((0, 0), (0, Cop - b.shape[1])))

    w_x_zrf = jnp.concatenate([fold(params["w_z_x"], Cip),
                               fold(params["w_r_x"], Cip),
                               fold(params["w_f_x"], Cip)], axis=0)  # (3Cop, 9Cip)
    w_h_zr = jnp.concatenate([fold(params["w_z_h"], Cop),
                              fold(params["w_r_h"], Cop)], axis=0)   # (2Cop, 9Cop)
    w_hr_f = fold(params["w_f_h"], Cop)                              # (Cop, 9Cop)
    b_zr = jnp.concatenate([pad_b(params["b_z"]), pad_b(params["b_r"])],
                           axis=1).reshape(2 * Cop, 1)
    b_f = pad_b(params["b_f"]).reshape(Cop, 1)

    weights = (w_x_zrf, w_h_zr, w_hr_f, b_zr, b_f)

    in_specs = [
        pl.BlockSpec((pl.Squeezed(), Cip, Lpad), lambda b: (b, 0, 0)),
        pl.BlockSpec((pl.Squeezed(), Cop, Lpad), lambda b: (b, 0, 0)),
    ] + [pl.BlockSpec(w.shape, lambda b: (0, 0)) for w in weights]

    kernel = functools.partial(_convgru_kernel, Wp=Wp, M=Mout, F=F)

    out = pl.pallas_call(
        kernel,
        out_shape=jax.ShapeDtypeStruct((B, Cop, Mout), jnp.float32),
        grid_spec=pltpu.PrefetchScalarGridSpec(
            num_scalar_prefetch=0,
            grid=(B,),
            in_specs=in_specs,
            out_specs=pl.BlockSpec((pl.Squeezed(), Cop, Mout),
                                   lambda b: (b, 0, 0)),
            scratch_shapes=[pltpu.VMEM((Cop, Lpad), jnp.float32)],
        ),
        compiler_params=pltpu.CompilerParams(
            dimension_semantics=("parallel",)),
    )(x_pad, h_pad, *weights)

    # (B, Cop, Mout) -> (B, Co, H, W): drop padded channels, the lane-pad
    # tail, and the junk left/right pad columns.
    return out[:, :Co, :M].reshape(B, Co, H, Wp)[:, :, :, 1:W + 1]


def init_params(key, in_channels, out_channels):
    """Deterministic synthetic parameters.

    conv_rz (in=Ci+Co, out=2*Co) and conv_f (in=Ci+Co, out=Co) are stored
    pre-split over the channel-concat (h-part / x-part) and the z/r output
    split, in HWIO layout (3, 3, Cin, Cout)."""
    ks = jax.random.split(key, 9)
    s = 0.1

    def w(k, cin):
        return s * jax.random.normal(k, (3, 3, cin, out_channels), jnp.float32)

    return {
        "w_z_h": w(ks[0], out_channels), "w_z_x": w(ks[1], in_channels),
        "b_z": s * jax.random.normal(ks[2], (1, out_channels), jnp.float32),
        "w_r_h": w(ks[3], out_channels), "w_r_x": w(ks[4], in_channels),
        "b_r": s * jax.random.normal(ks[5], (1, out_channels), jnp.float32),
        "w_f_h": w(ks[6], out_channels), "w_f_x": w(ks[7], in_channels),
        "b_f": s * jax.random.normal(ks[8], (1, out_channels), jnp.float32),
    }


def reference_cell(x_nchw, h_nchw, params):
    """Pure-JAX reference mirroring the PyTorch module (lax.conv based)."""
    x = jnp.transpose(x_nchw, (0, 2, 3, 1))
    h = jnp.transpose(h_nchw, (0, 2, 3, 1))
    Co = h.shape[-1]

    w_rz = jnp.concatenate(
        [jnp.concatenate([params["w_z_h"], params["w_z_x"]], axis=2),
         jnp.concatenate([params["w_r_h"], params["w_r_x"]], axis=2)], axis=3)
    b_rz = jnp.concatenate([params["b_z"][0], params["b_r"][0]])
    w_f = jnp.concatenate([params["w_f_h"], params["w_f_x"]], axis=2)
    b_f = params["b_f"][0]

    def conv(inp, w, b):
        y = jax.lax.conv_general_dilated(
            inp, w, window_strides=(1, 1), padding=((1, 1), (1, 1)),
            dimension_numbers=("NHWC", "HWIO", "NHWC"))
        return y + b.reshape(1, 1, 1, -1)

    rz = conv(jnp.concatenate([h, x], axis=-1), w_rz, b_rz)
    z, r = rz[..., :Co], rz[..., Co:]
    update_gate, reset_gate = jax.nn.sigmoid(z), jax.nn.sigmoid(r)
    f = conv(jnp.concatenate([h * reset_gate, x], axis=-1), w_f, b_f)
    h_new = (1.0 - update_gate) * h + update_gate * jnp.tanh(f)
    return jnp.transpose(h_new, (0, 3, 1, 2))


if __name__ == "__main__":
    key = jax.random.PRNGKey(0)
    B, Ci, Co, H, W = 2, 4, 8, 16, 16
    pkey, xkey1, xkey2 = jax.random.split(key, 3)
    params = init_params(pkey, Ci, Co)

    x1 = jax.random.normal(xkey1, (B, Ci, H, W), jnp.float32)
    x2 = jax.random.normal(xkey2, (B, Ci, H, W), jnp.float32)
    h0 = jnp.zeros((B, Co, H, W), jnp.float32)   # module starts with zero state

    # two recurrent steps through the Pallas kernel
    h1 = conv_gru_cell(x1, h0, params)
    h2 = conv_gru_cell(x2, h1, params)
    jax.block_until_ready(h2)

    # validate against the pure-JAX reference
    h1_ref = reference_cell(x1, h0, params)
    h2_ref = reference_cell(x2, h1_ref, params)
    np.testing.assert_allclose(np.asarray(h1), np.asarray(h1_ref),
                               rtol=2e-4, atol=2e-4)
    np.testing.assert_allclose(np.asarray(h2), np.asarray(h2_ref),
                               rtol=2e-4, atol=2e-4)

    assert h2.shape == (B, Co, H, W) and h2.dtype == jnp.float32
    print("KERNEL_OK")
</pallas_src>

<mosaic_0001>
module attributes {stable_mosaic.version = 11 : i64} {
  func.func @_convgru_kernel(%arg0: i32, %arg1: memref<1x8x640xf32, #tpu.memory_space<vmem>>, %arg2: memref<1x8x640xf32, #tpu.memory_space<vmem>>, %arg3: memref<24x72xf32, #tpu.memory_space<vmem>>, %arg4: memref<16x72xf32, #tpu.memory_space<vmem>>, %arg5: memref<8x72xf32, #tpu.memory_space<vmem>>, %arg6: memref<16x1xf32, #tpu.memory_space<vmem>>, %arg7: memref<8x1xf32, #tpu.memory_space<vmem>>, %arg8: memref<1x8x384xf32, #tpu.memory_space<vmem>>, %arg9: memref<8x640xf32, #tpu.memory_space<vmem>>) attributes {dimension_semantics = [#tpu.dimension_semantics<parallel>], iteration_bounds = array<i64: 2>, scalar_prefetch = 0 : i64, scratch_operands = 1 : i64, tpu.core_type = #tpu.core_type<tc>, window_params = [{transform_indices = @transform_0, window_bounds = array<i64: 1, 8, 640>}, {transform_indices = @transform_1, window_bounds = array<i64: 1, 8, 640>}, {pipeline_mode = #tpu.pipeline_mode<synchronous>, transform_indices = @transform_2, window_bounds = array<i64: 24, 72>}, {pipeline_mode = #tpu.pipeline_mode<synchronous>, transform_indices = @transform_3, window_bounds = array<i64: 16, 72>}, {pipeline_mode = #tpu.pipeline_mode<synchronous>, transform_indices = @transform_4, window_bounds = array<i64: 8, 72>}, {pipeline_mode = #tpu.pipeline_mode<synchronous>, transform_indices = @transform_5, window_bounds = array<i64: 16, 1>}, {pipeline_mode = #tpu.pipeline_mode<synchronous>, transform_indices = @transform_6, window_bounds = array<i64: 8, 1>}, {transform_indices = @transform_7, window_bounds = array<i64: 1, 8, 384>}]} {
    %c0 = arith.constant 0 : index
    %c0_0 = arith.constant 0 : index
    %c109 = arith.constant 109 : index
    %0 = vector.load %arg1[%c0, %c0_0, %c109] : memref<1x8x640xf32, #tpu.memory_space<vmem>>, vector<1x8x384xf32>
    %1 = vector.shape_cast %0 : vector<1x8x384xf32> to vector<8x384xf32>
    %c0_1 = arith.constant 0 : index
    %c0_2 = arith.constant 0 : index
    %c110 = arith.constant 110 : index
    %2 = vector.load %arg1[%c0_1, %c0_2, %c110] : memref<1x8x640xf32, #tpu.memory_space<vmem>>, vector<1x8x384xf32>
    %3 = vector.shape_cast %2 : vector<1x8x384xf32> to vector<8x384xf32>
    %c0_3 = arith.constant 0 : index
    %c0_4 = arith.constant 0 : index
    %c111 = arith.constant 111 : index
    %4 = vector.load %arg1[%c0_3, %c0_4, %c111] : memref<1x8x640xf32, #tpu.memory_space<vmem>>, vector<1x8x384xf32>
    %5 = vector.shape_cast %4 : vector<1x8x384xf32> to vector<8x384xf32>
    %c0_5 = arith.constant 0 : index
    %c0_6 = arith.constant 0 : index
    %c127 = arith.constant 127 : index
    %6 = vector.load %arg1[%c0_5, %c0_6, %c127] : memref<1x8x640xf32, #tpu.memory_space<vmem>>, vector<1x8x384xf32>
    %7 = vector.shape_cast %6 : vector<1x8x384xf32> to vector<8x384xf32>
    %c0_7 = arith.constant 0 : index
    %c0_8 = arith.constant 0 : index
    %c128 = arith.constant 128 : index
    %8 = vector.load %arg1[%c0_7, %c0_8, %c128] : memref<1x8x640xf32, #tpu.memory_space<vmem>>, vector<1x8x384xf32>
    %9 = vector.shape_cast %8 : vector<1x8x384xf32> to vector<8x384xf32>
    %c0_9 = arith.constant 0 : index
    %c0_10 = arith.constant 0 : index
    %c129 = arith.constant 129 : index
    %10 = vector.load %arg1[%c0_9, %c0_10, %c129] : memref<1x8x640xf32, #tpu.memory_space<vmem>>, vector<1x8x384xf32>
    %11 = vector.shape_cast %10 : vector<1x8x384xf32> to vector<8x384xf32>
    %c0_11 = arith.constant 0 : index
    %c0_12 = arith.constant 0 : index
    %c145 = arith.constant 145 : index
    %12 = vector.load %arg1[%c0_11, %c0_12, %c145] : memref<1x8x640xf32, #tpu.memory_space<vmem>>, vector<1x8x384xf32>
    %13 = vector.shape_cast %12 : vector<1x8x384xf32> to vector<8x384xf32>
    %c0_13 = arith.constant 0 : index
    %c0_14 = arith.constant 0 : index
    %c146 = arith.constant 146 : index
    %14 = vector.load %arg1[%c0_13, %c0_14, %c146] : memref<1x8x640xf32, #tpu.memory_space<vmem>>, vector<1x8x384xf32>
    %15 = vector.shape_cast %14 : vector<1x8x384xf32> to vector<8x384xf32>
    %c0_15 = arith.constant 0 : index
    %c0_16 = arith.constant 0 : index
    %c147 = arith.constant 147 : index
    %16 = vector.load %arg1[%c0_15, %c0_16, %c147] : memref<1x8x640xf32, #tpu.memory_space<vmem>>, vector<1x8x384xf32>
    %17 = vector.shape_cast %16 : vector<1x8x384xf32> to vector<8x384xf32>
    %18 = tpu.concatenate %1, %3, %5, %7, %9, %11, %13, %15, %17 in 0 : vector<8x384xf32>, vector<8x384xf32>, vector<8x384xf32>, vector<8x384xf32>, vector<8x384xf32>, vector<8x384xf32>, vector<8x384xf32>, vector<8x384xf32>, vector<8x384xf32> -> vector<72x384xf32>
    %c0_17 = arith.constant 0 : index
    %c0_18 = arith.constant 0 : index
    %c109_19 = arith.constant 109 : index
    %19 = vector.load %arg2[%c0_17, %c0_18, %c109_19] : memref<1x8x640xf32, #tpu.memory_space<vmem>>, vector<1x8x384xf32>
    %20 = vector.shape_cast %19 : vector<1x8x384xf32> to vector<8x384xf32>
    %c0_20 = arith.constant 0 : index
    %c0_21 = arith.constant 0 : index
    %c110_22 = arith.constant 110 : index
    %21 = vector.load %arg2[%c0_20, %c0_21, %c110_22] : memref<1x8x640xf32, #tpu.memory_space<vmem>>, vector<1x8x384xf32>
    %22 = vector.shape_cast %21 : vector<1x8x384xf32> to vector<8x384xf32>
    %c0_23 = arith.constant 0 : index
    %c0_24 = arith.constant 0 : index
    %c111_25 = arith.constant 111 : index
    %23 = vector.load %arg2[%c0_23, %c0_24, %c111_25] : memref<1x8x640xf32, #tpu.memory_space<vmem>>, vector<1x8x384xf32>
    %24 = vector.shape_cast %23 : vector<1x8x384xf32> to vector<8x384xf32>
    %c0_26 = arith.constant 0 : index
    %c0_27 = arith.constant 0 : index
    %c127_28 = arith.constant 127 : index
    %25 = vector.load %arg2[%c0_26, %c0_27, %c127_28] : memref<1x8x640xf32, #tpu.memory_space<vmem>>, vector<1x8x384xf32>
    %26 = vector.shape_cast %25 : vector<1x8x384xf32> to vector<8x384xf32>
    %c0_29 = arith.constant 0 : index
    %c0_30 = arith.constant 0 : index
    %c128_31 = arith.constant 128 : index
    %27 = vector.load %arg2[%c0_29, %c0_30, %c128_31] : memref<1x8x640xf32, #tpu.memory_space<vmem>>, vector<1x8x384xf32>
    %28 = vector.shape_cast %27 : vector<1x8x384xf32> to vector<8x384xf32>
    %c0_32 = arith.constant 0 : index
    %c0_33 = arith.constant 0 : index
    %c129_34 = arith.constant 129 : index
    %29 = vector.load %arg2[%c0_32, %c0_33, %c129_34] : memref<1x8x640xf32, #tpu.memory_space<vmem>>, vector<1x8x384xf32>
    %30 = vector.shape_cast %29 : vector<1x8x384xf32> to vector<8x384xf32>
    %c0_35 = arith.constant 0 : index
    %c0_36 = arith.constant 0 : index
    %c145_37 = arith.constant 145 : index
    %31 = vector.load %arg2[%c0_35, %c0_36, %c145_37] : memref<1x8x640xf32, #tpu.memory_space<vmem>>, vector<1x8x384xf32>
    %32 = vector.shape_cast %31 : vector<1x8x384xf32> to vector<8x384xf32>
    %c0_38 = arith.constant 0 : index
    %c0_39 = arith.constant 0 : index
    %c146_40 = arith.constant 146 : index
    %33 = vector.load %arg2[%c0_38, %c0_39, %c146_40] : memref<1x8x640xf32, #tpu.memory_space<vmem>>, vector<1x8x384xf32>
    %34 = vector.shape_cast %33 : vector<1x8x384xf32> to vector<8x384xf32>
    %c0_41 = arith.constant 0 : index
    %c0_42 = arith.constant 0 : index
    %c147_43 = arith.constant 147 : index
    %35 = vector.load %arg2[%c0_41, %c0_42, %c147_43] : memref<1x8x640xf32, #tpu.memory_space<vmem>>, vector<1x8x384xf32>
    %36 = vector.shape_cast %35 : vector<1x8x384xf32> to vector<8x384xf32>
    %37 = tpu.concatenate %20, %22, %24, %26, %28, %30, %32, %34, %36 in 0 : vector<8x384xf32>, vector<8x384xf32>, vector<8x384xf32>, vector<8x384xf32>, vector<8x384xf32>, vector<8x384xf32>, vector<8x384xf32>, vector<8x384xf32>, vector<8x384xf32> -> vector<72x384xf32>
    %c0_44 = arith.constant 0 : index
    %c0_45 = arith.constant 0 : index
    %38 = vector.load %arg3[%c0_44, %c0_45] : memref<24x72xf32, #tpu.memory_space<vmem>>, vector<24x72xf32>
    %cst = arith.constant dense<0.000000e+00> : vector<24x384xf32>
    %39 = tpu.matmul %38, %18, %cst {dimension_numbers = #tpu.dot_dimension_numbers<[1], [0], [0], [1], [0, 0, 1, 1], [], []>} : vector<24x72xf32>, vector<72x384xf32>, vector<24x384xf32> -> vector<24x384xf32>
    %c0_46 = arith.constant 0 : index
    %c0_47 = arith.constant 0 : index
    %40 = vector.load %arg4[%c0_46, %c0_47] : memref<16x72xf32, #tpu.memory_space<vmem>>, vector<16x72xf32>
    %cst_48 = arith.constant dense<0.000000e+00> : vector<16x384xf32>
    %41 = tpu.matmul %40, %37, %cst_48 {dimension_numbers = #tpu.dot_dimension_numbers<[1], [0], [0], [1], [0, 0, 1, 1], [], []>} : vector<16x72xf32>, vector<72x384xf32>, vector<16x384xf32> -> vector<16x384xf32>
    %42 = vector.extract_strided_slice %39 {offsets = [0, 0], sizes = [16, 384], strides = [1, 1]} : vector<24x384xf32> to vector<16x384xf32>
    %43 = arith.addf %42, %41 : vector<16x384xf32>
    %c0_49 = arith.constant 0 : index
    %c0_50 = arith.constant 0 : index
    %44 = vector.load %arg6[%c0_49, %c0_50] : memref<16x1xf32, #tpu.memory_space<vmem>>, vector<16x1xf32>
    %45 = vector.broadcast %44 : vector<16x1xf32> to vector<16x384xf32>
    %46 = arith.addf %43, %45 : vector<16x384xf32>
    %cst_51 = arith.constant 5.000000e-01 : f32
    %47 = vector.broadcast %cst_51 : f32 to vector<16x384xf32>
    %48 = arith.mulf %47, %46 : vector<16x384xf32>
    %49 = math.tanh %48 : vector<16x384xf32>
    %cst_52 = arith.constant 1.000000e+00 : f32
    %50 = vector.broadcast %cst_52 : f32 to vector<16x384xf32>
    %51 = arith.addf %49, %50 : vector<16x384xf32>
    %cst_53 = arith.constant 5.000000e-01 : f32
    %52 = vector.broadcast %cst_53 : f32 to vector<16x384xf32>
    %53 = arith.mulf %52, %51 : vector<16x384xf32>
    %54 = vector.extract_strided_slice %53 {offsets = [0, 0], sizes = [8, 384], strides = [1, 1]} : vector<16x384xf32> to vector<8x384xf32>
    %55 = vector.extract_strided_slice %53 {offsets = [8, 0], sizes = [8, 384], strides = [1, 1]} : vector<16x384xf32> to vector<8x384xf32>
    %c0_54 = arith.constant 0 : index
    %c0_55 = arith.constant 0 : index
    %c128_56 = arith.constant 128 : index
    %56 = vector.load %arg2[%c0_54, %c0_55, %c128_56] : memref<1x8x640xf32, #tpu.memory_space<vmem>>, vector<1x8x384xf32>
    %57 = vector.shape_cast %56 : vector<1x8x384xf32> to vector<8x384xf32>
    %cst_57 = arith.constant 0.000000e+00 : f32
    %58 = vector.broadcast %cst_57 : f32 to vector<8x128xf32>
    %c0_58 = arith.constant 0 : index
    %c0_59 = arith.constant 0 : index
    %59 = vector.load %arg9[%c0_58, %c0_59] : memref<8x640xf32, #tpu.memory_space<vmem>>, vector<8x128xf32>
    tpu.vector_store %arg9[%c0_58, %c0_59], %58 {strides = array<i32>} : memref<8x640xf32, #tpu.memory_space<vmem>>, vector<8x128xf32>,
    %cst_60 = arith.constant 0.000000e+00 : f32
    %60 = vector.broadcast %cst_60 : f32 to vector<8x128xf32>
    %c0_61 = arith.constant 0 : index
    %c512 = arith.constant 512 : index
    %61 = vector.load %arg9[%c0_61, %c512] : memref<8x640xf32, #tpu.memory_space<vmem>>, vector<8x128xf32>
    tpu.vector_store %arg9[%c0_61, %c512], %60 {strides = array<i32>} : memref<8x640xf32, #tpu.memory_space<vmem>>, vector<8x128xf32>,
    %62 = arith.mulf %57, %55 : vector<8x384xf32>
    %c0_62 = arith.constant 0 : index
    %c128_63 = arith.constant 128 : index
    %63 = vector.load %arg9[%c0_62, %c128_63] : memref<8x640xf32, #tpu.memory_space<vmem>>, vector<8x384xf32>
    tpu.vector_store %arg9[%c0_62, %c128_63], %62 {strides = array<i32>} : memref<8x640xf32, #tpu.memory_space<vmem>>, vector<8x384xf32>,
    %c0_64 = arith.constant 0 : index
    %c109_65 = arith.constant 109 : index
    %64 = vector.load %arg9[%c0_64, %c109_65] : memref<8x640xf32, #tpu.memory_space<vmem>>, vector<8x384xf32>
    %c0_66 = arith.constant 0 : index
    %c110_67 = arith.constant 110 : index
    %65 = vector.load %arg9[%c0_66, %c110_67] : memref<8x640xf32, #tpu.memory_space<vmem>>, vector<8x384xf32>
    %c0_68 = arith.constant 0 : index
    %c111_69 = arith.constant 111 : index
    %66 = vector.load %arg9[%c0_68, %c111_69] : memref<8x640xf32, #tpu.memory_space<vmem>>, vector<8x384xf32>
    %c0_70 = arith.constant 0 : index
    %c127_71 = arith.constant 127 : index
    %67 = vector.load %arg9[%c0_70, %c127_71] : memref<8x640xf32, #tpu.memory_space<vmem>>, vector<8x384xf32>
    %c0_72 = arith.constant 0 : index
    %c128_73 = arith.constant 128 : index
    %68 = vector.load %arg9[%c0_72, %c128_73] : memref<8x640xf32, #tpu.memory_space<vmem>>, vector<8x384xf32>
    %c0_74 = arith.constant 0 : index
    %c129_75 = arith.constant 129 : index
    %69 = vector.load %arg9[%c0_74, %c129_75] : memref<8x640xf32, #tpu.memory_space<vmem>>, vector<8x384xf32>
    %c0_76 = arith.constant 0 : index
    %c145_77 = arith.constant 145 : index
    %70 = vector.load %arg9[%c0_76, %c145_77] : memref<8x640xf32, #tpu.memory_space<vmem>>, vector<8x384xf32>
    %c0_78 = arith.constant 0 : index
    %c146_79 = arith.constant 146 : index
    %71 = vector.load %arg9[%c0_78, %c146_79] : memref<8x640xf32, #tpu.memory_space<vmem>>, vector<8x384xf32>
    %c0_80 = arith.constant 0 : index
    %c147_81 = arith.constant 147 : index
    %72 = vector.load %arg9[%c0_80, %c147_81] : memref<8x640xf32, #tpu.memory_space<vmem>>, vector<8x384xf32>
    %73 = tpu.concatenate %64, %65, %66, %67, %68, %69, %70, %71, %72 in 0 : vector<8x384xf32>, vector<8x384xf32>, vector<8x384xf32>, vector<8x384xf32>, vector<8x384xf32>, vector<8x384xf32>, vector<8x384xf32>, vector<8x384xf32>, vector<8x384xf32> -> vector<72x384xf32>
    %74 = vector.extract_strided_slice %39 {offsets = [16, 0], sizes = [8, 384], strides = [1, 1]} : vector<24x384xf32> to vector<8x384xf32>
    %c0_82 = arith.constant 0 : index
    %c0_83 = arith.constant 0 : index
    %75 = vector.load %arg5[%c0_82, %c0_83] : memref<8x72xf32, #tpu.memory_space<vmem>>, vector<8x72xf32>
    %cst_84 = arith.constant dense<0.000000e+00> : vector<8x384xf32>
    %76 = tpu.matmul %75, %73, %cst_84 {dimension_numbers = #tpu.dot_dimension_numbers<[1], [0], [0], [1], [0, 0, 1, 1], [], []>} : vector<8x72xf32>, vector<72x384xf32>, vector<8x384xf32> -> vector<8x384xf32>
    %77 = arith.addf %74, %76 : vector<8x384xf32>
    %c0_85 = arith.constant 0 : index
    %c0_86 = arith.constant 0 : index
    %78 = vector.load %arg7[%c0_85, %c0_86] : memref<8x1xf32, #tpu.memory_space<vmem>>, vector<8x1xf32>
    %79 = vector.broadcast %78 : vector<8x1xf32> to vector<8x384xf32>
    %80 = arith.addf %77, %79 : vector<8x384xf32>
    %81 = math.tanh %80 : vector<8x384xf32>
    %82 = arith.subf %81, %57 : vector<8x384xf32>
    %83 = arith.mulf %54, %82 : vector<8x384xf32>
    %84 = arith.addf %57, %83 : vector<8x384xf32>
    %c0_87 = arith.constant 0 : index
    %c0_88 = arith.constant 0 : index
    %c0_89 = arith.constant 0 : index
    %85 = vector.load %arg8[%c0_87, %c0_88, %c0_89] : memref<1x8x384xf32, #tpu.memory_space<vmem>>, vector<1x8x384xf32>
    %86 = vector.shape_cast %85 : vector<1x8x384xf32> to vector<8x384xf32>
    %87 = vector.shape_cast %84 : vector<8x384xf32> to vector<1x8x384xf32>
    tpu.vector_store %arg8[%c0_87, %c0_88, %c0_89], %87 {strides = array<i32>} : memref<1x8x384xf32, #tpu.memory_space<vmem>>, vector<1x8x384xf32>,
    return
  }
  func.func @transform_0(%arg0: i32) -> (i32, i32, i32) {
    %c0_i32 = arith.constant 0 : i32
    %c0_i32_0 = arith.constant 0 : i32
    %c0_i32_1 = arith.constant 0 : i32
    return %arg0, %c0_i32, %c0_i32_0 : i32, i32, i32
  }
  func.func @transform_1(%arg0: i32) -> (i32, i32, i32) {
    %c0_i32 = arith.constant 0 : i32
    %c0_i32_0 = arith.constant 0 : i32
    %c0_i32_1 = arith.constant 0 : i32
    return %arg0, %c0_i32, %c0_i32_0 : i32, i32, i32
  }
  func.func @transform_2(%arg0: i32) -> (i32, i32) {
    %c0_i32 = arith.constant 0 : i32
    %c0_i32_0 = arith.constant 0 : i32
    %c0_i32_1 = arith.constant 0 : i32
    return %c0_i32, %c0_i32_0 : i32, i32
  }
  func.func @transform_3(%arg0: i32) -> (i32, i32) {
    %c0_i32 = arith.constant 0 : i32
    %c0_i32_0 = arith.constant 0 : i32
    %c0_i32_1 = arith.constant 0 : i32
    return %c0_i32, %c0_i32_0 : i32, i32
  }
  func.func @transform_4(%arg0: i32) -> (i32, i32) {
    %c0_i32 = arith.constant 0 : i32
    %c0_i32_0 = arith.constant 0 : i32
    %c0_i32_1 = arith.constant 0 : i32
    return %c0_i32, %c0_i32_0 : i32, i32
  }
  func.func @transform_5(%arg0: i32) -> (i32, i32) {
    %c0_i32 = arith.constant 0 : i32
    %c0_i32_0 = arith.constant 0 : i32
    %c0_i32_1 = arith.constant 0 : i32
    return %c0_i32, %c0_i32_0 : i32, i32
  }
  func.func @transform_6(%arg0: i32) -> (i32, i32) {
    %c0_i32 = arith.constant 0 : i32
    %c0_i32_0 = arith.constant 0 : i32
    %c0_i32_1 = arith.constant 0 : i32
    return %c0_i32, %c0_i32_0 : i32, i32
  }
  func.func @transform_7(%arg0: i32) -> (i32, i32, i32) {
    %c0_i32 = arith.constant 0 : i32
    %c0_i32_0 = arith.constant 0 : i32
    %c0_i32_1 = arith.constant 0 : i32
    return %arg0, %c0_i32, %c0_i32_0 : i32, i32, i32
  }
}

</mosaic_0001>

<llo_original>
// kernel: tpu_custom_call.1
$region0: #{tpu_custom_call.1}
  #allocation0 [shape = 'u32[]', space=smem, size = 0x4, offset = 0x4, fixed_abs, tag = 'smem constant byte address 0x4 - core index']
  #allocation1 [shape = 'u32[144,128]{1,0:T(1,128)}', space=vmem, size = 0x12000, scoped, tag = 'internal scratch']
  #allocation2 [shape = 'f32[8,640]{1,0:T(8,128)}', space=vmem, size = 0x5000, scoped, tag = 'scratch operand']
  %s0 = inlined_call_operand.hbm [shape: f32[2,8,640], index: 0, kind: input, shape index: {}]
  %s1 = inlined_call_operand.hbm [shape: f32[2,8,640], index: 1, kind: input, shape index: {}]
  %s2 = inlined_call_operand.vmem [shape: f32[24,72], index: 2, kind: input, shape index: {}]
  %s3 = inlined_call_operand.hbm [shape: f32[16,72], index: 3, kind: input, shape index: {}]
  %s4 = inlined_call_operand.vmem [shape: f32[8,72], index: 4, kind: input, shape index: {}]
  %s5 = inlined_call_operand.vmem [shape: f32[16,1], index: 5, kind: input, shape index: {}]
  %s6 = inlined_call_operand.vmem [shape: f32[8,1], index: 6, kind: input, shape index: {}]
  %s7 = inlined_call_operand.hbm [shape: f32[2,8,384], index: 7, kind: output, shape index: {}]
  %s8 = sld [smem:[#allocation0]]
  $region73: #{tpu_custom_call.1} parent=0
    _
  %s10 = ssub.s32 1, %s8
  %s11 = scalar_select 0, %s10, %s8
  $region1: #{tpu_custom_call.1} parent=0
    #allocation3 [shape = 'u8[40960]{0}', space=vmem, size = 0xa000, scoped, tag = 'input window, operand 0']
    #allocation4 [shape = 's32[2]{0}', space=sflag, size = 0x8, scoped, tag = 'scoped memory for tpu_custom_call.1']
    #allocation5 [shape = 's32[2]{0}', space=sflag, size = 0x8, scoped, tag = 'scoped memory for tpu_custom_call.1']
    #allocation6 [shape = 'u8[40960]{0}', space=vmem, size = 0xa000, scoped, tag = 'input window, operand 1']
    #allocation7 [shape = 's32[2]{0}', space=sflag, size = 0x8, scoped, tag = 'scoped memory for tpu_custom_call.1']
    #allocation8 [shape = 'u8[8192]{0}', space=vmem, size = 0x2000, scoped, tag = 'input window, operand 3, single buffered']
    #allocation9 [shape = 'u8[24576]{0}', space=vmem, size = 0x6000, scoped, tag = 'output window, operand 0']
    %12 = vsyncpa [#allocation4], 0
    %s13 = scalar_lea.sflag [#allocation4], 1
    %14 = vsyncpa %s13, 0
    %15 = vsyncpa [#allocation7], 0
    %s16 = scalar_lea.sflag [#allocation7], 1
    %17 = vsyncpa %s16, 0
    %18 = vsyncpa [#allocation5], 0
    %s19 = scalar_lea.sflag [#allocation5], 1
    %20 = vsyncpa %s19, 0
    loop: start=0, step=1, limit=4
    $region2: #{tpu_custom_call.1} parent=1 // loop_pre_header
      _
    $region3: #{tpu_custom_call.1} parent=1 // loop_header
      %s22 = sphi 0, %s26
      %p23 = scmp.ge.s32.totalorder %s22, 4
      %s32 = sphi 0, %s34
      %s35 = sphi 0, %s32
      %s36 = sphi 0, %s35
      %s52 = sphi 0, %s36
      %s58 = sphi 0, %s60
      %s61 = sphi 0, %s58
      %s62 = sphi 0, %s61
      %s78 = sphi 0, %s62
      %s82 = sphi 0, %s82
      %s84 = sphi 0, %s82
      %s85 = sphi 0, %s84
      %s99 = sphi 0, %s85
      %s103 = sphi 0, %s103
      %s105 = sphi 0, %s103
      %s106 = sphi 0, %s105
      %s120 = sphi 0, %s106
      %s124 = sphi 0, %s124
      %s126 = sphi 0, %s124
      %s127 = sphi 0, %s126
      %s141 = sphi 0, %s127
      %s145 = sphi 0, %s145
      %s147 = sphi 0, %s145
      %s148 = sphi 0, %s147
      %s162 = sphi 0, %s148
      %s166 = sphi 0, %s166
      %s168 = sphi 0, %s166
      %s169 = sphi 0, %s168
      %s183 = sphi 0, %s169
      %s189 = sphi 0, %s191
      %s192 = sphi 0, %s189
      %s193 = sphi 0, %s192
      %s209 = sphi 0, %s193
    $region4: #{tpu_custom_call.1} parent=1 // loop_header_branch
      %25 = sbr.rel (%p23) target = $region8
    $region5: #{tpu_custom_call.1} parent=1 // loop_body
      %s27 = ssub.s32 %s22, 1
      %s28 = ssub.s32 %s22, 2
      %s29 = sadd.s32 %s22, 1
      %s30 = ssub.s32 %s22, %s29
      %p31 = scmp.eq.s32.totalorder %s30, 0
      %s33 = sadd.s32 %s32, 1
      %s34 = scalar_select %p31, %s32, %s33
      %p37 = pneg %p31
      %p38 = scmp.eq.s32.totalorder %s22, 1
      %p39 = por %p37, %p38
      %p40 = scmp.ne.s32.totalorder %s32, %s35
      %p41 = scmp.eq.s32.totalorder %s22, 0
      %p42 = por %p40, %p41
      %p43 = scmp.ne.s32.totalorder %s32, %s35
      %p44 = scmp.eq.s32.totalorder %s27, 1
      %p45 = por %p43, %p44
      %p46 = scmp.ne.s32.totalorder %s35, %s36
      %p47 = scmp.eq.s32.totalorder %s27, 0
      %p48 = por %p46, %p47
      %p49 = scmp.ne.s32.totalorder %s35, %s36
      %p50 = scmp.eq.s32.totalorder %s28, 1
      %p51 = por %p49, %p50
      %p53 = scmp.ne.s32.totalorder %s36, %s52
      %p54 = scmp.eq.s32.totalorder %s28, 0
      %p55 = por %p53, %p54
      %s56 = ssub.s32 %s22, %s29
      %p57 = scmp.eq.s32.totalorder %s56, 0
      %s59 = sadd.s32 %s58, 1
      %s60 = scalar_select %p57, %s58, %s59
      %p63 = pneg %p57
      %p64 = scmp.eq.s32.totalorder %s22, 1
      %p65 = por %p63, %p64
      %p66 = scmp.ne.s32.totalorder %s58, %s61
      %p67 = scmp.eq.s32.totalorder %s22, 0
      %p68 = por %p66, %p67
      %p69 = scmp.ne.s32.totalorder %s58, %s61
      %p70 = scmp.eq.s32.totalorder %s27, 1
      %p71 = por %p69, %p70
      %p72 = scmp.ne.s32.totalorder %s61, %s62
      %p73 = scmp.eq.s32.totalorder %s27, 0
      %p74 = por %p72, %p73
      %p75 = scmp.ne.s32.totalorder %s61, %s62
      %p76 = scmp.eq.s32.totalorder %s28, 1
      %p77 = por %p75, %p76
      %p79 = scmp.ne.s32.totalorder %s62, %s78
      %p80 = scmp.eq.s32.totalorder %s28, 0
      %p81 = por %p79, %p80
      %s83 = sadd.s32 %s82, 1
      %p86 = scmp.eq.s32.totalorder %s22, 1
      %p87 = scmp.ne.s32.totalorder %s82, %s84
      %p88 = scmp.eq.s32.totalorder %s22, 0
      %p89 = por %p87, %p88
      %p90 = scmp.ne.s32.totalorder %s82, %s84
      %p91 = scmp.eq.s32.totalorder %s27, 1
      %p92 = por %p90, %p91
      %p93 = scmp.ne.s32.totalorder %s84, %s85
      %p94 = scmp.eq.s32.totalorder %s27, 0
      %p95 = por %p93, %p94
      %p96 = scmp.ne.s32.totalorder %s84, %s85
      %p97 = scmp.eq.s32.totalorder %s28, 1
      %p98 = por %p96, %p97
      %p100 = scmp.ne.s32.totalorder %s85, %s99
      %p101 = scmp.eq.s32.totalorder %s28, 0
      %p102 = por %p100, %p101
      %s104 = sadd.s32 %s103, 1
      %p107 = scmp.eq.s32.totalorder %s22, 1
      %p108 = scmp.ne.s32.totalorder %s103, %s105
      %p109 = scmp.eq.s32.totalorder %s22, 0
      %p110 = por %p108, %p109
      %p111 = scmp.ne.s32.totalorder %s103, %s105
      %p112 = scmp.eq.s32.totalorder %s27, 1
      %p113 = por %p111, %p112
      %p114 = scmp.ne.s32.totalorder %s105, %s106
      %p115 = scmp.eq.s32.totalorder %s27, 0
      %p116 = por %p114, %p115
      %p117 = scmp.ne.s32.totalorder %s105, %s106
      %p118 = scmp.eq.s32.totalorder %s28, 1
      %p119 = por %p117, %p118
      %p121 = scmp.ne.s32.totalorder %s106, %s120
      %p122 = scmp.eq.s32.totalorder %s28, 0
      %p123 = por %p121, %p122
      %s125 = sadd.s32 %s124, 1
      %p128 = scmp.eq.s32.totalorder %s22, 1
      %p129 = scmp.ne.s32.totalorder %s124, %s126
      %p130 = scmp.eq.s32.totalorder %s22, 0
      %p131 = por %p129, %p130
      %p132 = scmp.ne.s32.totalorder %s124, %s126
      %p133 = scmp.eq.s32.totalorder %s27, 1
      %p134 = por %p132, %p133
      %p135 = scmp.ne.s32.totalorder %s126, %s127
      %p136 = scmp.eq.s32.totalorder %s27, 0
      %p137 = por %p135, %p136
      %p138 = scmp.ne.s32.totalorder %s126, %s127
      %p139 = scmp.eq.s32.totalorder %s28, 1
      %p140 = por %p138, %p139
      %p142 = scmp.ne.s32.totalorder %s127, %s141
      %p143 = scmp.eq.s32.totalorder %s28, 0
      %p144 = por %p142, %p143
      %s146 = sadd.s32 %s145, 1
      %p149 = scmp.eq.s32.totalorder %s22, 1
      %p150 = scmp.ne.s32.totalorder %s145, %s147
      %p151 = scmp.eq.s32.totalorder %s22, 0
      %p152 = por %p150, %p151
      %p153 = scmp.ne.s32.totalorder %s145, %s147
      %p154 = scmp.eq.s32.totalorder %s27, 1
      %p155 = por %p153, %p154
      %p156 = scmp.ne.s32.totalorder %s147, %s148
      %p157 = scmp.eq.s32.totalorder %s27, 0
      %p158 = por %p156, %p157
      %p159 = scmp.ne.s32.totalorder %s147, %s148
      %p160 = scmp.eq.s32.totalorder %s28, 1
      %p161 = por %p159, %p160
      %p163 = scmp.ne.s32.totalorder %s148, %s162
      %p164 = scmp.eq.s32.totalorder %s28, 0
      %p165 = por %p163, %p164
      %s167 = sadd.s32 %s166, 1
      %p170 = scmp.eq.s32.totalorder %s22, 1
      %p171 = scmp.ne.s32.totalorder %s166, %s168
      %p172 = scmp.eq.s32.totalorder %s22, 0
      %p173 = por %p171, %p172
      %p174 = scmp.ne.s32.totalorder %s166, %s168
      %p175 = scmp.eq.s32.totalorder %s27, 1
      %p176 = por %p174, %p175
      %p177 = scmp.ne.s32.totalorder %s168, %s169
      %p178 = scmp.eq.s32.totalorder %s27, 0
      %p179 = por %p177, %p178
      %p180 = scmp.ne.s32.totalorder %s168, %s169
      %p181 = scmp.eq.s32.totalorder %s28, 1
      %p182 = por %p180, %p181
      %p184 = scmp.ne.s32.totalorder %s169, %s183
      %p185 = scmp.eq.s32.totalorder %s28, 0
      %p186 = por %p184, %p185
      %s187 = ssub.s32 %s22, %s29
      %p188 = scmp.eq.s32.totalorder %s187, 0
      %s190 = sadd.s32 %s189, 1
      %s191 = scalar_select %p188, %s189, %s190
      %p194 = pneg %p188
      %p195 = scmp.eq.s32.totalorder %s22, 1
      %p196 = por %p194, %p195
      %p197 = scmp.ne.s32.totalorder %s189, %s192
      %p198 = scmp.eq.s32.totalorder %s22, 0
      %p199 = por %p197, %p198
      %p200 = scmp.ne.s32.totalorder %s189, %s192
      %p201 = scmp.eq.s32.totalorder %s27, 1
      %p202 = por %p200, %p201
      %p203 = scmp.ne.s32.totalorder %s192, %s193
      %p204 = scmp.eq.s32.totalorder %s27, 0
      %p205 = por %p203, %p204
      %p206 = scmp.ne.s32.totalorder %s192, %s193
      %p207 = scmp.eq.s32.totalorder %s28, 1
      %p208 = por %p206, %p207
      %p210 = scmp.ne.s32.totalorder %s193, %s209
      %p211 = scmp.eq.s32.totalorder %s28, 0
      %p212 = por %p210, %p211
      %p213 = scmp.le.s32.totalorder 1, %s22
      %p214 = scmp.lt.s32.totalorder %s22, 3
      %p215 = pnand %p213, %p214
      %p216 = pneg %p215
      // Predicated region
      $region9: #{tpu_custom_call.1} parent=5 // pred_check
        _
      $region10: #{tpu_custom_call.1} parent=5 // pred_check_branch
        %218 = sbr.rel (%p215) target = $region12
      $region11: #{tpu_custom_call.1} parent=5 // pred_region
        %s219 = ssub.s32 %s22, 1
        // Predicated region
        $region13: #{tpu_custom_call.1} parent=11 // pred_check
          %p220 = pneg %p95
        $region14: #{tpu_custom_call.1} parent=11 // pred_check_branch
          %222 = sbr.rel (%p220) target = $region16
        $region15: #{tpu_custom_call.1} parent=11 // pred_region
          _
        $region16: #{tpu_custom_call.1} parent=11 // pred_fallthru
          _
        // Predicated region
        $region17: #{tpu_custom_call.1} parent=11 // pred_check
          %p223 = pneg %p116
        $region18: #{tpu_custom_call.1} parent=11 // pred_check_branch
          %225 = sbr.rel (%p223) target = $region20
        $region19: #{tpu_custom_call.1} parent=11 // pred_region
          %s227 = ssub.s32 256, 256
          %228 = vsyncadd [#allocation7], %s227
          %s229 = sshll.u32 [#allocation8], 4
          %s230 = int_to_ptr.vmem [resolvable:$true] %s229
          %235 = dma.hbm_to_vmem [thread:$0]  %s3, 256, %s230, [#allocation7], 128, 128, 8
        $region20: #{tpu_custom_call.1} parent=11 // pred_fallthru
          _
        // Predicated region
        $region21: #{tpu_custom_call.1} parent=11 // pred_check
          %p236 = pneg %p137
        $region22: #{tpu_custom_call.1} parent=11 // pred_check_branch
          %238 = sbr.rel (%p236) target = $region24
        $region23: #{tpu_custom_call.1} parent=11 // pred_region
          _
        $region24: #{tpu_custom_call.1} parent=11 // pred_fallthru
          _
        // Predicated region
        $region25: #{tpu_custom_call.1} parent=11 // pred_check
          %p239 = pneg %p158
        $region26: #{tpu_custom_call.1} parent=11 // pred_check_branch
          %241 = sbr.rel (%p239) target = $region28
        $region27: #{tpu_custom_call.1} parent=11 // pred_region
          _
        $region28: #{tpu_custom_call.1} parent=11 // pred_fallthru
          _
        // Predicated region
        $region29: #{tpu_custom_call.1} parent=11 // pred_check
          %p242 = pneg %p179
        $region30: #{tpu_custom_call.1} parent=11 // pred_check_branch
          %244 = sbr.rel (%p242) target = $region32
        $region31: #{tpu_custom_call.1} parent=11 // pred_region
          _
        $region32: #{tpu_custom_call.1} parent=11 // pred_fallthru
          _
      $region12: #{tpu_custom_call.1} parent=5 // pred_fallthru
        _
      %p245 = scmp.lt.s32.totalorder %s22, 2
      // Predicated region
      $region33: #{tpu_custom_call.1} parent=5 // pred_check
        %p246 = pneg %p245
      $region34: #{tpu_custom_call.1} parent=5 // pred_check_branch
        %248 = sbr.rel (%p246) target = $region36
      $region35: #{tpu_custom_call.1} parent=5 // pred_region
        // Predicated region
        $region37: #{tpu_custom_call.1} parent=35 // pred_check
          %p249 = pneg %p42
        $region38: #{tpu_custom_call.1} parent=35 // pred_check_branch
          %251 = sbr.rel (%p249) target = $region40
        $region39: #{tpu_custom_call.1} parent=35 // pred_region
          %s252 = sand.u32 %s32, 1
          %s253 = scalar_lea.sflag [#allocation4], %s252
          %s254 = sand.u32 %s32, 1
          %s255 = smul.addr %s254, 40
          %s256 = scalar_lea.vmem [#allocation3], %s255
          %s258 = ssub.s32 640, 640
          %259 = vsyncadd %s253, %s258
          %s260 = smul.addr %s22, 5
          %s261 = smul.addr %s260, 128
          %s262 = scalar_lea.hbm %s0, %s261
          %s264 = sshll.u32 %s256, 4
          %s265 = int_to_ptr.vmem [resolvable:$true] %s264
          %267 = dma.hbm_to_vmem [thread:$0]  %s262, 640, %s265, %s253
        $region40: #{tpu_custom_call.1} parent=35 // pred_fallthru
          _
        // Predicated region
        $region41: #{tpu_custom_call.1} parent=35 // pred_check
          %p268 = pneg %p68
        $region42: #{tpu_custom_call.1} parent=35 // pred_check_branch
          %270 = sbr.rel (%p268) target = $region44
        $region43: #{tpu_custom_call.1} parent=35 // pred_region
          %s271 = sand.u32 %s22, 1
          %s272 = scalar_lea.sflag [#allocation7], %s271
          %s273 = sand.u32 %s58, 1
          %s274 = smul.addr %s273, 40
          %s275 = scalar_lea.vmem [#allocation6], %s274
          %s277 = ssub.s32 640, 640
          %278 = vsyncadd %s272, %s277
          %s279 = smul.addr %s22, 5
          %s280 = smul.addr %s279, 128
          %s281 = scalar_lea.hbm %s1, %s280
          %s283 = sshll.u32 %s275, 4
          %s284 = int_to_ptr.vmem [resolvable:$true] %s283
          %286 = dma.hbm_to_vmem [thread:$0]  %s281, 640, %s284, %s272
        $region44: #{tpu_custom_call.1} parent=35 // pred_fallthru
          _
      $region36: #{tpu_custom_call.1} parent=5 // pred_fallthru
        _
      %p287 = scmp.le.s32.totalorder 1, %s22
      %p288 = scmp.lt.s32.totalorder %s22, 3
      %p289 = pnand %p287, %p288
      %p290 = pneg %p289
      // Predicated region
      $region45: #{tpu_custom_call.1} parent=5 // pred_check
        _
      $region46: #{tpu_custom_call.1} parent=5 // pred_check_branch
        %292 = sbr.rel (%p289) target = $region48
      $region47: #{tpu_custom_call.1} parent=5 // pred_region
        %s293 = ssub.s32 %s22, 1
        %s294 = sand.u32 %s35, 1
        %s295 = scalar_lea.sflag [#allocation4], %s294
        %s296 = sand.u32 %s35, 1
        %s297 = smul.addr %s296, 40
        %s298 = scalar_lea.vmem [#allocation3], %s297
        // Predicated region
        $region49: #{tpu_custom_call.1} parent=47 // pred_check
          %p299 = pneg %p48
        $region50: #{tpu_custom_call.1} parent=47 // pred_check_branch
          %301 = sbr.rel (%p299) target = $region52
        $region51: #{tpu_custom_call.1} parent=47 // pred_region
          %302 = dma.done %s295, 640
        $region52: #{tpu_custom_call.1} parent=47 // pred_fallthru
          _
        %s303 = sand.u32 %s27, 1
        %s304 = scalar_lea.sflag [#allocation7], %s303
        %s305 = sand.u32 %s61, 1
        %s306 = smul.addr %s305, 40
        %s307 = scalar_lea.vmem [#allocation6], %s306
        // Predicated region
        $region53: #{tpu_custom_call.1} parent=47 // pred_check
          %p308 = pneg %p74
        $region54: #{tpu_custom_call.1} parent=47 // pred_check_branch
          %310 = sbr.rel (%p308) target = $region56
        $region55: #{tpu_custom_call.1} parent=47 // pred_region
          %311 = dma.done %s304, 640
        $region56: #{tpu_custom_call.1} parent=47 // pred_fallthru
          _
        // Predicated region
        $region57: #{tpu_custom_call.1} parent=47 // pred_check
          %p312 = pneg %p116
        $region58: #{tpu_custom_call.1} parent=47 // pred_check_branch
          %314 = sbr.rel (%p312) target = $region60
        $region59: #{tpu_custom_call.1} parent=47 // pred_region
          %315 = dma.done [#allocation7], 256
        $region60: #{tpu_custom_call.1} parent=47 // pred_fallthru
          _
        %s316 = sand.u32 %s35, 1
        %s317 = scalar_lea.sflag [#allocation4], %s316
        %s318 = sand.u32 %s35, 1
        %s319 = smul.addr %s318, 40
        %s320 = scalar_lea.vmem [#allocation3], %s319
        %p321 = pneg %p48
        %p322 = pneg %p45
        %s323 = sand.u32 %s27, 1
        %s324 = scalar_lea.sflag [#allocation7], %s323
        %s325 = sand.u32 %s61, 1
        %s326 = smul.addr %s325, 40
        %s327 = scalar_lea.vmem [#allocation6], %s326
        %p328 = pneg %p74
        %p329 = pneg %p71
        %p330 = pneg %p95
        %p331 = pneg %p92
        %p332 = pneg %p116
        %p333 = pneg %p113
        %p334 = pneg %p137
        %p335 = pneg %p134
        %p336 = pneg %p158
        %p337 = pneg %p155
        %p338 = pneg %p179
        %p339 = pneg %p176
        %p340 = pneg %p205
        %p341 = pneg %p202
        %s342 = sand.u32 %s192, 1
        %s343 = scalar_lea.sflag [#allocation5], %s342
        %s344 = sand.u32 %s192, 1
        %s345 = smul.addr %s344, 24
        %s346 = scalar_lea.vmem [#allocation9], %s345
        %v347 = vld [vmem:[%s298] sm:$0xff]
        %v348 = vld [vmem:[%s298 + $0x8] sm:$0xff]
        %v349 = vld [vmem:[%s298 + $0x10] sm:$0xff]
        %v350 = vld [vmem:[%s298 + $0x18] sm:$0xff]
        %v351 = vld [vmem:[%s298 + $0x8] sm:$0xff]
        %v352 = vld [vmem:[%s298 + $0x10] sm:$0xff]
        %v353 = vld [vmem:[%s298 + $0x18] sm:$0xff]
        %v354 = vld [vmem:[%s298 + $0x20] sm:$0xff]
        %359 = vrot.lane.b32.xlu0 %v347, 127
        %v360 = vpop.permute.xlu0 %359
        %361 = vrot.lane.b32.xlu0 %v348, 127
        %v362 = vpop.permute.xlu0 %361
        %363 = vrot.lane.b32.xlu0 %v349, 127
        %v364 = vpop.permute.xlu0 %363
        %365 = vrot.lane.b32.xlu0 %v350, 127
        %v366 = vpop.permute.xlu0 %365
        %vm367 = vcmask 1039360
        %v368 = vsel %vm367, %v360, %v362
        %v369 = vsel %vm367, %v362, %v364
        %v370 = vsel %vm367, %v364, %v366
        %371 = vrot.lane.b32.xlu0 %v347, 126
        %v372 = vpop.permute.xlu0 %371
        %373 = vrot.lane.b32.xlu0 %v348, 126
        %v374 = vpop.permute.xlu0 %373
        %375 = vrot.lane.b32.xlu0 %v349, 126
        %v376 = vpop.permute.xlu0 %375
        %377 = vrot.lane.b32.xlu0 %v350, 126
        %v378 = vpop.permute.xlu0 %377
        %vm379 = vcmask 1031168
        %v380 = vsel %vm379, %v372, %v374
        %v381 = vsel %vm379, %v374, %v376
        %v382 = vsel %vm379, %v376, %v378
        %383 = vrot.lane.b32.xlu0 %v347, 110
        %v384 = vpop.permute.xlu0 %383
        %385 = vrot.lane.b32.xlu0 %v348, 110
        %v386 = vpop.permute.xlu0 %385
        %387 = vrot.lane.b32.xlu0 %v349, 110
        %v388 = vpop.permute.xlu0 %387
        %389 = vrot.lane.b32.xlu0 %v350, 110
        %v390 = vpop.permute.xlu0 %389
        %vm391 = vcmask 900096
        %v392 = vsel %vm391, %v384, %v386
        %v393 = vsel %vm391, %v386, %v388
        %v394 = vsel %vm391, %v388, %v390
        %395 = vrot.lane.b32.xlu0 %v348, 109
        %v396 = vpop.permute.xlu0 %395
        %397 = vrot.lane.b32.xlu0 %v349, 109
        %v398 = vpop.permute.xlu0 %397
        %399 = vrot.lane.b32.xlu0 %v350, 109
        %v400 = vpop.permute.xlu0 %399
        %vm401 = vcmask 891904
        %v402 = vsel %vm401, %v396, %v398
        %v403 = vsel %vm401, %v398, %v400
        %408 = vrot.lane.b32.xlu0 %v351, 108
        %v409 = vpop.permute.xlu0 %408
        %410 = vrot.lane.b32.xlu0 %v352, 108
        %v411 = vpop.permute.xlu0 %410
        %412 = vrot.lane.b32.xlu0 %v353, 108
        %v413 = vpop.permute.xlu0 %412
        %414 = vrot.lane.b32.xlu0 %v354, 108
        %v415 = vpop.permute.xlu0 %414
        %vm416 = vcmask 883712
        %v417 = vsel %vm416, %v409, %v411
        %v418 = vsel %vm416, %v411, %v413
        %v419 = vsel %vm416, %v413, %v415
        %420 = vrot.lane.b32.xlu0 %v351, 92
        %v421 = vpop.permute.xlu0 %420
        %422 = vrot.lane.b32.xlu0 %v352, 92
        %v423 = vpop.permute.xlu0 %422
        %424 = vrot.lane.b32.xlu0 %v353, 92
        %v425 = vpop.permute.xlu0 %424
        %426 = vrot.lane.b32.xlu0 %v354, 92
        %v427 = vpop.permute.xlu0 %426
        %vm428 = vcmask 752640
        %v429 = vsel %vm428, %v421, %v423
        %v430 = vsel %vm428, %v423, %v425
        %v431 = vsel %vm428, %v425, %v427
        %432 = vrot.lane.b32.xlu0 %v351, 91
        %v433 = vpop.permute.xlu0 %432
        %434 = vrot.lane.b32.xlu0 %v352, 91
        %v435 = vpop.permute.xlu0 %434
        %436 = vrot.lane.b32.xlu0 %v353, 91
        %v437 = vpop.permute.xlu0 %436
        %438 = vrot.lane.b32.xlu0 %v354, 91
        %v439 = vpop.permute.xlu0 %438
        %vm440 = vcmask 744448
        %v441 = vsel %vm440, %v433, %v435
        %v442 = vsel %vm440, %v435, %v437
        %v443 = vsel %vm440, %v437, %v439
        %444 = vrot.lane.b32.xlu0 %v351, 90
        %v445 = vpop.permute.xlu0 %444
        %446 = vrot.lane.b32.xlu0 %v352, 90
        %v447 = vpop.permute.xlu0 %446
        %448 = vrot.lane.b32.xlu0 %v353, 90
        %v449 = vpop.permute.xlu0 %448
        %450 = vrot.lane.b32.xlu0 %v354, 90
        %v451 = vpop.permute.xlu0 %450
        %vm452 = vcmask 736256
        %v453 = vsel %vm452, %v445, %v447
        %v454 = vsel %vm452, %v447, %v449
        %v455 = vsel %vm452, %v449, %v451
        %v456 = vld [vmem:[%s307] sm:$0xff]
        %v457 = vld [vmem:[%s307 + $0x8] sm:$0xff]
        %v458 = vld [vmem:[%s307 + $0x10] sm:$0xff]
        %v459 = vld [vmem:[%s307 + $0x18] sm:$0xff]
        %v460 = vld [vmem:[%s307 + $0x8] sm:$0xff]
        %v461 = vld [vmem:[%s307 + $0x10] sm:$0xff]
        %v462 = vld [vmem:[%s307 + $0x18] sm:$0xff]
        %v463 = vld [vmem:[%s307 + $0x20] sm:$0xff]
        %468 = vrot.lane.b32.xlu0 %v456, 127
        %v469 = vpop.permute.xlu0 %468
        %470 = vrot.lane.b32.xlu0 %v457, 127
        %v471 = vpop.permute.xlu0 %470
        %472 = vrot.lane.b32.xlu0 %v458, 127
        %v473 = vpop.permute.xlu0 %472
        %474 = vrot.lane.b32.xlu0 %v459, 127
        %v475 = vpop.permute.xlu0 %474
        %v476 = vsel %vm367, %v469, %v471
        %v477 = vsel %vm367, %v471, %v473
        %v478 = vsel %vm367, %v473, %v475
        %479 = vrot.lane.b32.xlu0 %v456, 126
        %v480 = vpop.permute.xlu0 %479
        %481 = vrot.lane.b32.xlu0 %v457, 126
        %v482 = vpop.permute.xlu0 %481
        %483 = vrot.lane.b32.xlu0 %v458, 126
        %v484 = vpop.permute.xlu0 %483
        %485 = vrot.lane.b32.xlu0 %v459, 126
        %v486 = vpop.permute.xlu0 %485
        %v487 = vsel %vm379, %v480, %v482
        %v488 = vsel %vm379, %v482, %v484
        %v489 = vsel %vm379, %v484, %v486
        %490 = vrot.lane.b32.xlu0 %v456, 110
        %v491 = vpop.permute.xlu0 %490
        %492 = vrot.lane.b32.xlu0 %v457, 110
        %v493 = vpop.permute.xlu0 %492
        %494 = vrot.lane.b32.xlu0 %v458, 110
        %v495 = vpop.permute.xlu0 %494
        %496 = vrot.lane.b32.xlu0 %v459, 110
        %v497 = vpop.permute.xlu0 %496
        %v498 = vsel %vm391, %v491, %v493
        %v499 = vsel %vm391, %v493, %v495
        %v500 = vsel %vm391, %v495, %v497
        %501 = vrot.lane.b32.xlu0 %v457, 109
        %v502 = vpop.permute.xlu0 %501
        %503 = vrot.lane.b32.xlu0 %v458, 109
        %v504 = vpop.permute.xlu0 %503
        %505 = vrot.lane.b32.xlu0 %v459, 109
        %v506 = vpop.permute.xlu0 %505
        %v507 = vsel %vm401, %v502, %v504
        %v508 = vsel %vm401, %v504, %v506
        %513 = vrot.lane.b32.xlu0 %v460, 108
        %v514 = vpop.permute.xlu0 %513
        %515 = vrot.lane.b32.xlu0 %v461, 108
        %v516 = vpop.permute.xlu0 %515
        %517 = vrot.lane.b32.xlu0 %v462, 108
        %v518 = vpop.permute.xlu0 %517
        %519 = vrot.lane.b32.xlu0 %v463, 108
        %v520 = vpop.permute.xlu0 %519
        %v521 = vsel %vm416, %v514, %v516
        %v522 = vsel %vm416, %v516, %v518
        %v523 = vsel %vm416, %v518, %v520
        %524 = vrot.lane.b32.xlu0 %v460, 92
        %v525 = vpop.permute.xlu0 %524
        %526 = vrot.lane.b32.xlu0 %v461, 92
        %v527 = vpop.permute.xlu0 %526
        %528 = vrot.lane.b32.xlu0 %v462, 92
        %v529 = vpop.permute.xlu0 %528
        %530 = vrot.lane.b32.xlu0 %v463, 92
        %v531 = vpop.permute.xlu0 %530
        %v532 = vsel %vm428, %v525, %v527
        %v533 = vsel %vm428, %v527, %v529
        %v534 = vsel %vm428, %v529, %v531
        %535 = vrot.lane.b32.xlu0 %v460, 91
        %v536 = vpop.permute.xlu0 %535
        %537 = vrot.lane.b32.xlu0 %v461, 91
        %v538 = vpop.permute.xlu0 %537
        %539 = vrot.lane.b32.xlu0 %v462, 91
        %v540 = vpop.permute.xlu0 %539
        %541 = vrot.lane.b32.xlu0 %v463, 91
        %v542 = vpop.permute.xlu0 %541
        %v543 = vsel %vm440, %v536, %v538
        %v544 = vsel %vm440, %v538, %v540
        %v545 = vsel %vm440, %v540, %v542
        %546 = vrot.lane.b32.xlu0 %v460, 90
        %v547 = vpop.permute.xlu0 %546
        %548 = vrot.lane.b32.xlu0 %v461, 90
        %v549 = vpop.permute.xlu0 %548
        %550 = vrot.lane.b32.xlu0 %v462, 90
        %v551 = vpop.permute.xlu0 %550
        %552 = vrot.lane.b32.xlu0 %v463, 90
        %v553 = vpop.permute.xlu0 %552
        %v554 = vsel %vm452, %v547, %v549
        %v555 = vsel %vm452, %v549, %v551
        %v556 = vsel %vm452, %v551, %v553
        %v557 = vld [vmem:[%s2] sm:$0xff]
        %v558 = vld [vmem:[%s2 + $0x8] sm:$0xff]
        %v559 = vld [vmem:[%s2 + $0x10] sm:$0xff]
        %560 = vrot.lane.b32.xlu0 %v347, 19
        %v561 = vpop.permute.xlu0 %560
        %562 = vrot.lane.b32.xlu0 %v348, 19
        %v563 = vpop.permute.xlu0 %562
        %564 = vrot.lane.b32.xlu0 %v349, 19
        %v565 = vpop.permute.xlu0 %564
        %566 = vrot.lane.b32.xlu0 %v350, 19
        %v567 = vpop.permute.xlu0 %566
        %568 = vrot.lane.b32.xlu0 %v368, 19
        %v569 = vpop.permute.xlu0 %568
        %570 = vrot.lane.b32.xlu0 %v369, 19
        %v571 = vpop.permute.xlu0 %570
        %572 = vrot.lane.b32.xlu0 %v370, 19
        %v573 = vpop.permute.xlu0 %572
        %574 = vrot.lane.b32.xlu0 %v366, 19
        %v575 = vpop.permute.xlu0 %574
        %576 = vrot.lane.b32.xlu0 %v380, 19
        %v577 = vpop.permute.xlu0 %576
        %578 = vrot.lane.b32.xlu0 %v381, 19
        %v579 = vpop.permute.xlu0 %578
        %580 = vrot.lane.b32.xlu0 %v382, 19
        %v581 = vpop.permute.xlu0 %580
        %582 = vrot.lane.b32.xlu0 %v378, 19
        %v583 = vpop.permute.xlu0 %582
        %584 = vrot.lane.b32.xlu0 %v392, 19
        %v585 = vpop.permute.xlu0 %584
        %586 = vrot.lane.b32.xlu0 %v393, 19
        %v587 = vpop.permute.xlu0 %586
        %588 = vrot.lane.b32.xlu0 %v394, 19
        %v589 = vpop.permute.xlu0 %588
        %590 = vrot.lane.b32.xlu0 %v390, 19
        %v591 = vpop.permute.xlu0 %590
        %592 = vrot.lane.b32.xlu0 %v396, 19
        %v593 = vpop.permute.xlu0 %592
        %594 = vrot.lane.b32.xlu0 %v402, 19
        %v595 = vpop.permute.xlu0 %594
        %596 = vrot.lane.b32.xlu0 %v403, 19
        %v597 = vpop.permute.xlu0 %596
        %598 = vrot.lane.b32.xlu0 %v400, 19
        %v599 = vpop.permute.xlu0 %598
        %600 = vrot.lane.b32.xlu0 %v409, 19
        %v601 = vpop.permute.xlu0 %600
        %602 = vrot.lane.b32.xlu0 %v417, 19
        %v603 = vpop.permute.xlu0 %602
        %604 = vrot.lane.b32.xlu0 %v418, 19
        %v605 = vpop.permute.xlu0 %604
        %606 = vrot.lane.b32.xlu0 %v419, 19
        %v607 = vpop.permute.xlu0 %606
        %608 = vrot.lane.b32.xlu0 %v421, 19
        %v609 = vpop.permute.xlu0 %608
        %610 = vrot.lane.b32.xlu0 %v429, 19
        %v611 = vpop.permute.xlu0 %610
        %612 = vrot.lane.b32.xlu0 %v430, 19
        %v613 = vpop.permute.xlu0 %612
        %614 = vrot.lane.b32.xlu0 %v431, 19
        %v615 = vpop.permute.xlu0 %614
        %616 = vrot.lane.b32.xlu0 %v433, 19
        %v617 = vpop.permute.xlu0 %616
        %618 = vrot.lane.b32.xlu0 %v441, 19
        %v619 = vpop.permute.xlu0 %618
        %620 = vrot.lane.b32.xlu0 %v442, 19
        %v621 = vpop.permute.xlu0 %620
        %622 = vrot.lane.b32.xlu0 %v443, 19
        %v623 = vpop.permute.xlu0 %622
        %624 = vrot.lane.b32.xlu0 %v445, 19
        %v625 = vpop.permute.xlu0 %624
        %626 = vrot.lane.b32.xlu0 %v453, 19
        %v627 = vpop.permute.xlu0 %626
        %628 = vrot.lane.b32.xlu0 %v454, 19
        %v629 = vpop.permute.xlu0 %628
        %630 = vrot.lane.b32.xlu0 %v455, 19
        %v631 = vpop.permute.xlu0 %630
        %vm632 = vcmask 154624
        %v633 = vsel %vm632, %v561, %v563
        %v634 = vsel %vm632, %v563, %v565
        %v635 = vsel %vm632, %v565, %v567
        %v636 = vsel %vm632, %v569, %v571
        %v637 = vsel %vm632, %v571, %v573
        %v638 = vsel %vm632, %v573, %v575
        %v639 = vsel %vm632, %v577, %v579
        %v640 = vsel %vm632, %v579, %v581
        %v641 = vsel %vm632, %v581, %v583
        %v642 = vsel %vm632, %v585, %v587
        %v643 = vsel %vm632, %v587, %v589
        %v644 = vsel %vm632, %v589, %v591
        %v645 = vsel %vm632, %v593, %v595
        %v646 = vsel %vm632, %v595, %v597
        %v647 = vsel %vm632, %v597, %v599
        %v648 = vsel %vm632, %v601, %v603
        %v649 = vsel %vm632, %v603, %v605
        %v650 = vsel %vm632, %v605, %v607
        %v651 = vsel %vm632, %v609, %v611
        %v652 = vsel %vm632, %v611, %v613
        %v653 = vsel %vm632, %v613, %v615
        %v654 = vsel %vm632, %v617, %v619
        %v655 = vsel %vm632, %v619, %v621
        %v656 = vsel %vm632, %v621, %v623
        %v657 = vsel %vm632, %v625, %v627
        %v658 = vsel %vm632, %v627, %v629
        %v659 = vsel %vm632, %v629, %v631
        %vm687 = vcmask 588800
        %v689 = vsel %vm687, %v557, 0
        %v692 = vsel %vm687, %v558, 0
        %v695 = vsel %vm687, %v559, 0
        %697 = vmatprep.subr.mxu0 %v634
        %698 = vmatpush1.msra.mxu0 %v633
        %699 = vmatprep.subr.mxu0 %v637
        %700 = vmatpush1.msra.mxu0 %v636
        %701 = vmatprep.subr.mxu0 %v640
        %702 = vmatpush1.msra.mxu0 %v639
        %703 = vmatprep.subr.mxu0 %v643
        %704 = vmatpush1.msra.mxu0 %v642
        %705 = vmatprep.subr.mxu0 %v646
        %706 = vmatpush1.msra.mxu0 %v645
        %707 = vmatprep.subr.mxu0 %v649
        %708 = vmatpush1.msra.mxu0 %v648
        %709 = vmatprep.subr.mxu0 %v652
        %710 = vmatpush1.msra.mxu0 %v651
        %711 = vmatprep.subr.mxu0 %v655
        %712 = vmatpush1.msra.mxu0 %v654
        %713 = vmatprep.subr.mxu0 %v658
        %714 = vmatpush1.msra.mxu0 %v657
        %715 = vmatprep.subr.mxu0 0.0
        %716 = vmatpush1.msra.mxu0 0.0
        %717 = vmatprep.subr.mxu0 0.0
        %718 = vmatpush1.msra.mxu0 0.0
        %719 = vmatprep.subr.mxu0 0.0
        %720 = vmatpush1.msra.mxu0 0.0
        %721 = vmatprep.subr.mxu0 0.0
        %722 = vmatpush1.msra.mxu0 0.0
        %723 = vmatprep.subr.mxu0 0.0
        %724 = vmatpush1.msra.mxu0 0.0
        %725 = vmatprep.subr.mxu0 0.0
        %726 = vmatpush1.msra.mxu0 0.0
        %727 = vmatprep.subr.mxu0 0.0
        %728 = vmatpush1.msra.mxu0 0.0
        %729 = vmatprep.subr.mxu0 0.0
        %730 = vmatpush1.msra.mxu0 0.0
        %731 = vmatprep.subr.mxu0 0.0
        %732 = vmatpush1.msra.mxu0 0.0
        %733 = vmatprep.subr.mxu0 0.0
        %734 = vmatpush1.msra.mxu0 0.0
        %735 = vmatprep.subr.mxu0 0.0
        %736 = vmatpush1.msra.mxu0 0.0
        %737 = vmatprep.subr.mxu0 0.0
        %738 = vmatpush1.msra.mxu0 0.0
        %739 = vmatprep.subr.mxu0 0.0
        %740 = vmatpush1.msra.mxu0 0.0
        %741 = vmatprep.subr.mxu0 0.0
        %742 = vmatpush1.msra.mxu0 0.0
        %743 = vmatprep.subr.mxu0 0.0
        %744 = vmatpush1.msra.mxu0 0.0
        %745 = vmatprep.subr.mxu0 0.0
        %746 = vmatpush1.msra.mxu0 0.0
        %747 = vmatprep.subr.mxu0 0.0
        %748 = vmatpush1.msra.mxu0 0.0
        %749 = vmatprep.subr.mxu0 0.0
        %750 = vmatpush1.msra.mxu0 0.0
        %751 = vmatprep.subr.mxu0 0.0
        %752 = vmatpush1.msra.mxu0 0.0
        %753 = vmatprep.subr.mxu0 0.0
        %754 = vmatpush1.msra.mxu0 0.0
        %755 = vmatprep.subr.mxu0 0.0
        %756 = vmatpush1.msra.mxu0 0.0
        %757 = vmatprep.subr.mxu0 0.0
        %758 = vmatpush1.msra.mxu0 0.0
        %759 = vmatprep.subr.mxu0 0.0
        %760 = vmatpush1.msra.mxu0 0.0
        %761 = vmatprep.mubr.f32.mxu0 0.0
        %762 = vmatmul.mubr.f32.gmra.mrb[0].mxu0 %v689
        %v763 = vpop.f32.mrb[0].mxu0
        %v764 = vadd.f32 0.0, %v763
        %v765 = vpop.f32.mrb[0].mxu0
        %v766 = vadd.f32 0.0, %v765
        %767 = vmatprep.mubr.f32.mxu0 0.0
        %768 = vmatmul.mubr.f32.gmra.mrb[0].mxu0 %v692
        %v769 = vpop.f32.mrb[0].mxu0
        %v770 = vadd.f32 0.0, %v769
        %v771 = vpop.f32.mrb[0].mxu0
        %v772 = vadd.f32 0.0, %v771
        %773 = vmatprep.mubr.f32.mxu0 0.0
        %774 = vmatmul.mubr.f32.gmra.mrb[0].mxu0 %v695
        %v775 = vpop.f32.mrb[0].mxu0
        %v776 = vadd.f32 0.0, %v775
        %v777 = vpop.f32.mrb[0].mxu0
        %v778 = vadd.f32 0.0, %v777
        %779 = vdwg.mxu0
        %780 = vmatprep.subr.mxu0 0.0
        %781 = vmatpush1.msra.mxu0 %v635
        %782 = vmatprep.subr.mxu0 0.0
        %783 = vmatpush1.msra.mxu0 %v638
        %784 = vmatprep.subr.mxu0 0.0
        %785 = vmatpush1.msra.mxu0 %v641
        %786 = vmatprep.subr.mxu0 0.0
        %787 = vmatpush1.msra.mxu0 %v644
        %788 = vmatprep.subr.mxu0 0.0
        %789 = vmatpush1.msra.mxu0 %v647
        %790 = vmatprep.subr.mxu0 0.0
        %791 = vmatpush1.msra.mxu0 %v650
        %792 = vmatprep.subr.mxu0 0.0
        %793 = vmatpush1.msra.mxu0 %v653
        %794 = vmatprep.subr.mxu0 0.0
        %795 = vmatpush1.msra.mxu0 %v656
        %796 = vmatprep.subr.mxu0 0.0
        %797 = vmatpush1.msra.mxu0 %v659
        %798 = vmatprep.subr.mxu0 0.0
        %799 = vmatpush1.msra.mxu0 0.0
        %800 = vmatprep.subr.mxu0 0.0
        %801 = vmatpush1.msra.mxu0 0.0
        %802 = vmatprep.subr.mxu0 0.0
        %803 = vmatpush1.msra.mxu0 0.0
        %804 = vmatprep.subr.mxu0 0.0
        %805 = vmatpush1.msra.mxu0 0.0
        %806 = vmatprep.subr.mxu0 0.0
        %807 = vmatpush1.msra.mxu0 0.0
        %808 = vmatprep.subr.mxu0 0.0
        %809 = vmatpush1.msra.mxu0 0.0
        %810 = vmatprep.subr.mxu0 0.0
        %811 = vmatpush1.msra.mxu0 0.0
        %812 = vmatprep.subr.mxu0 0.0
        %813 = vmatpush1.msra.mxu0 0.0
        %814 = vmatprep.subr.mxu0 0.0
        %815 = vmatpush1.msra.mxu0 0.0
        %816 = vmatprep.subr.mxu0 0.0
        %817 = vmatpush1.msra.mxu0 0.0
        %818 = vmatprep.subr.mxu0 0.0
        %819 = vmatpush1.msra.mxu0 0.0
        %820 = vmatprep.subr.mxu0 0.0
        %821 = vmatpush1.msra.mxu0 0.0
        %822 = vmatprep.subr.mxu0 0.0
        %823 = vmatpush1.msra.mxu0 0.0
        %824 = vmatprep.subr.mxu0 0.0
        %825 = vmatpush1.msra.mxu0 0.0
        %826 = vmatprep.subr.mxu0 0.0
        %827 = vmatpush1.msra.mxu0 0.0
        %828 = vmatprep.subr.mxu0 0.0
        %829 = vmatpush1.msra.mxu0 0.0
        %830 = vmatprep.subr.mxu0 0.0
        %831 = vmatpush1.msra.mxu0 0.0
        %832 = vmatprep.subr.mxu0 0.0
        %833 = vmatpush1.msra.mxu0 0.0
        %834 = vmatprep.subr.mxu0 0.0
        %835 = vmatpush1.msra.mxu0 0.0
        %836 = vmatprep.subr.mxu0 0.0
        %837 = vmatpush1.msra.mxu0 0.0
        %838 = vmatprep.subr.mxu0 0.0
        %839 = vmatpush1.msra.mxu0 0.0
        %840 = vmatprep.subr.mxu0 0.0
        %841 = vmatpush1.msra.mxu0 0.0
        %842 = vmatprep.subr.mxu0 0.0
        %843 = vmatpush1.msra.mxu0 0.0
        %844 = vmatprep.mubr.f32.mxu0 0.0
        %845 = vmatmul.mubr.f32.gmra.mrb[0].mxu0 %v689
        %v846 = vpop.f32.mrb[0].mxu0
        %v847 = vadd.f32 0.0, %v846
        %v848 = vpop.f32.mrb[0].mxu0
        %849 = vmatprep.mubr.f32.mxu0 0.0
        %850 = vmatmul.mubr.f32.gmra.mrb[0].mxu0 %v692
        %v851 = vpop.f32.mrb[0].mxu0
        %v852 = vadd.f32 0.0, %v851
        %v853 = vpop.f32.mrb[0].mxu0
        %854 = vmatprep.mubr.f32.mxu0 0.0
        %855 = vmatmul.mubr.f32.gmra.mrb[0].mxu0 %v695
        %v856 = vpop.f32.mrb[0].mxu0
        %v857 = vadd.f32 0.0, %v856
        %v858 = vpop.f32.mrb[0].mxu0
        %859 = vdwg.mxu0
        %v860 = vld [vmem:[#allocation8] sm:$0xff]
        %v861 = vld [vmem:[#allocation8 + $0x8] sm:$0xff]
        %862 = vrot.lane.b32.xlu0 %v456, 19
        %v863 = vpop.permute.xlu0 %862
        %864 = vrot.lane.b32.xlu0 %v457, 19
        %v865 = vpop.permute.xlu0 %864
        %866 = vrot.lane.b32.xlu0 %v458, 19
        %v867 = vpop.permute.xlu0 %866
        %868 = vrot.lane.b32.xlu0 %v459, 19
        %v869 = vpop.permute.xlu0 %868
        %870 = vrot.lane.b32.xlu0 %v476, 19
        %v871 = vpop.permute.xlu0 %870
        %872 = vrot.lane.b32.xlu0 %v477, 19
        %v873 = vpop.permute.xlu0 %872
        %874 = vrot.lane.b32.xlu0 %v478, 19
        %v875 = vpop.permute.xlu0 %874
        %876 = vrot.lane.b32.xlu0 %v475, 19
        %v877 = vpop.permute.xlu0 %876
        %878 = vrot.lane.b32.xlu0 %v487, 19
        %v879 = vpop.permute.xlu0 %878
        %880 = vrot.lane.b32.xlu0 %v488, 19
        %v881 = vpop.permute.xlu0 %880
        %882 = vrot.lane.b32.xlu0 %v489, 19
        %v883 = vpop.permute.xlu0 %882
        %884 = vrot.lane.b32.xlu0 %v486, 19
        %v885 = vpop.permute.xlu0 %884
        %886 = vrot.lane.b32.xlu0 %v498, 19
        %v887 = vpop.permute.xlu0 %886
        %888 = vrot.lane.b32.xlu0 %v499, 19
        %v889 = vpop.permute.xlu0 %888
        %890 = vrot.lane.b32.xlu0 %v500, 19
        %v891 = vpop.permute.xlu0 %890
        %892 = vrot.lane.b32.xlu0 %v497, 19
        %v893 = vpop.permute.xlu0 %892
        %894 = vrot.lane.b32.xlu0 %v502, 19
        %v895 = vpop.permute.xlu0 %894
        %896 = vrot.lane.b32.xlu0 %v507, 19
        %v897 = vpop.permute.xlu0 %896
        %898 = vrot.lane.b32.xlu0 %v508, 19
        %v899 = vpop.permute.xlu0 %898
        %900 = vrot.lane.b32.xlu0 %v506, 19
        %v901 = vpop.permute.xlu0 %900
        %902 = vrot.lane.b32.xlu0 %v514, 19
        %v903 = vpop.permute.xlu0 %902
        %904 = vrot.lane.b32.xlu0 %v521, 19
        %v905 = vpop.permute.xlu0 %904
        %906 = vrot.lane.b32.xlu0 %v522, 19
        %v907 = vpop.permute.xlu0 %906
        %908 = vrot.lane.b32.xlu0 %v523, 19
        %v909 = vpop.permute.xlu0 %908
        %910 = vrot.lane.b32.xlu0 %v525, 19
        %v911 = vpop.permute.xlu0 %910
        %912 = vrot.lane.b32.xlu0 %v532, 19
        %v913 = vpop.permute.xlu0 %912
        %914 = vrot.lane.b32.xlu0 %v533, 19
        %v915 = vpop.permute.xlu0 %914
        %916 = vrot.lane.b32.xlu0 %v534, 19
        %v917 = vpop.permute.xlu0 %916
        %918 = vrot.lane.b32.xlu0 %v536, 19
        %v919 = vpop.permute.xlu0 %918
        %920 = vrot.lane.b32.xlu0 %v543, 19
        %v921 = vpop.permute.xlu0 %920
        %922 = vrot.lane.b32.xlu0 %v544, 19
        %v923 = vpop.permute.xlu0 %922
        %924 = vrot.lane.b32.xlu0 %v545, 19
        %v925 = vpop.permute.xlu0 %924
        %926 = vrot.lane.b32.xlu0 %v547, 19
        %v927 = vpop.permute.xlu0 %926
        %928 = vrot.lane.b32.xlu0 %v554, 19
        %v929 = vpop.permute.xlu0 %928
        %930 = vrot.lane.b32.xlu0 %v555, 19
        %v931 = vpop.permute.xlu0 %930
        %932 = vrot.lane.b32.xlu0 %v556, 19
        %v933 = vpop.permute.xlu0 %932
        %v934 = vsel %vm632, %v863, %v865
        %v935 = vsel %vm632, %v865, %v867
        %v936 = vsel %vm632, %v867, %v869
        %v937 = vsel %vm632, %v871, %v873
        %v938 = vsel %vm632, %v873, %v875
        %v939 = vsel %vm632, %v875, %v877
        %v940 = vsel %vm632, %v879, %v881
        %v941 = vsel %vm632, %v881, %v883
        %v942 = vsel %vm632, %v883, %v885
        %v943 = vsel %vm632, %v887, %v889
        %v944 = vsel %vm632, %v889, %v891
        %v945 = vsel %vm632, %v891, %v893
        %v946 = vsel %vm632, %v895, %v897
        %v947 = vsel %vm632, %v897, %v899
        %v948 = vsel %vm632, %v899, %v901
        %v949 = vsel %vm632, %v903, %v905
        %v950 = vsel %vm632, %v905, %v907
        %v951 = vsel %vm632, %v907, %v909
        %v952 = vsel %vm632, %v911, %v913
        %v953 = vsel %vm632, %v913, %v915
        %v954 = vsel %vm632, %v915, %v917
        %v955 = vsel %vm632, %v919, %v921
        %v956 = vsel %vm632, %v921, %v923
        %v957 = vsel %vm632, %v923, %v925
        %v958 = vsel %vm632, %v927, %v929
        %v959 = vsel %vm632, %v929, %v931
        %v960 = vsel %vm632, %v931, %v933
        %v989 = vsel %vm687, %v860, 0
        %v992 = vsel %vm687, %v861, 0
        %994 = vmatprep.subr.mxu0 %v935
        %995 = vmatpush1.msra.mxu0 %v934
        %996 = vmatprep.subr.mxu0 %v938
        %997 = vmatpush1.msra.mxu0 %v937
        %998 = vmatprep.subr.mxu0 %v941
        %999 = vmatpush1.msra.mxu0 %v940
        %1000 = vmatprep.subr.mxu0 %v944
        %1001 = vmatpush1.msra.mxu0 %v943
        %1002 = vmatprep.subr.mxu0 %v947
        %1003 = vmatpush1.msra.mxu0 %v946
        %1004 = vmatprep.subr.mxu0 %v950
        %1005 = vmatpush1.msra.mxu0 %v949
        %1006 = vmatprep.subr.mxu0 %v953
        %1007 = vmatpush1.msra.mxu0 %v952
        %1008 = vmatprep.subr.mxu0 %v956
        %1009 = vmatpush1.msra.mxu0 %v955
        %1010 = vmatprep.subr.mxu0 %v959
        %1011 = vmatpush1.msra.mxu0 %v958
        %1012 = vmatprep.subr.mxu0 0.0
        %1013 = vmatpush1.msra.mxu0 0.0
        %1014 = vmatprep.subr.mxu0 0.0
        %1015 = vmatpush1.msra.mxu0 0.0
        %1016 = vmatprep.subr.mxu0 0.0
        %1017 = vmatpush1.msra.mxu0 0.0
        %1018 = vmatprep.subr.mxu0 0.0
        %1019 = vmatpush1.msra.mxu0 0.0
        %1020 = vmatprep.subr.mxu0 0.0
        %1021 = vmatpush1.msra.mxu0 0.0
        %1022 = vmatprep.subr.mxu0 0.0
        %1023 = vmatpush1.msra.mxu0 0.0
        %1024 = vmatprep.subr.mxu0 0.0
        %1025 = vmatpush1.msra.mxu0 0.0
        %1026 = vmatprep.subr.mxu0 0.0
        %1027 = vmatpush1.msra.mxu0 0.0
        %1028 = vmatprep.subr.mxu0 0.0
        %1029 = vmatpush1.msra.mxu0 0.0
        %1030 = vmatprep.subr.mxu0 0.0
        %1031 = vmatpush1.msra.mxu0 0.0
        %1032 = vmatprep.subr.mxu0 0.0
        %1033 = vmatpush1.msra.mxu0 0.0
        %1034 = vmatprep.subr.mxu0 0.0
        %1035 = vmatpush1.msra.mxu0 0.0
        %1036 = vmatprep.subr.mxu0 0.0
        %1037 = vmatpush1.msra.mxu0 0.0
        %1038 = vmatprep.subr.mxu0 0.0
        %1039 = vmatpush1.msra.mxu0 0.0
        %1040 = vmatprep.subr.mxu0 0.0
        %1041 = vmatpush1.msra.mxu0 0.0
        %1042 = vmatprep.subr.mxu0 0.0
        %1043 = vmatpush1.msra.mxu0 0.0
        %1044 = vmatprep.subr.mxu0 0.0
        %1045 = vmatpush1.msra.mxu0 0.0
        %1046 = vmatprep.subr.mxu0 0.0
        %1047 = vmatpush1.msra.mxu0 0.0
        %1048 = vmatprep.subr.mxu0 0.0
        %1049 = vmatpush1.msra.mxu0 0.0
        %1050 = vmatprep.subr.mxu0 0.0
        %1051 = vmatpush1.msra.mxu0 0.0
        %1052 = vmatprep.subr.mxu0 0.0
        %1053 = vmatpush1.msra.mxu0 0.0
        %1054 = vmatprep.subr.mxu0 0.0
        %1055 = vmatpush1.msra.mxu0 0.0
        %1056 = vmatprep.subr.mxu0 0.0
        %1057 = vmatpush1.msra.mxu0 0.0
        %1058 = vmatprep.mubr.f32.mxu0 0.0
        %1059 = vmatmul.mubr.f32.gmra.mrb[0].mxu0 %v989
        %v1060 = vpop.f32.mrb[0].mxu0
        %v1061 = vadd.f32 0.0, %v1060
        %v1062 = vpop.f32.mrb[0].mxu0
        %v1063 = vadd.f32 0.0, %v1062
        %1064 = vmatprep.mubr.f32.mxu0 0.0
        %1065 = vmatmul.mubr.f32.gmra.mrb[0].mxu0 %v992
        %v1066 = vpop.f32.mrb[0].mxu0
        %v1067 = vadd.f32 0.0, %v1066
        %v1068 = vpop.f32.mrb[0].mxu0
        %v1069 = vadd.f32 0.0, %v1068
        %1070 = vdwg.mxu0
        %1071 = vmatprep.subr.mxu0 0.0
        %1072 = vmatpush1.msra.mxu0 %v936
        %1073 = vmatprep.subr.mxu0 0.0
        %1074 = vmatpush1.msra.mxu0 %v939
        %1075 = vmatprep.subr.mxu0 0.0
        %1076 = vmatpush1.msra.mxu0 %v942
        %1077 = vmatprep.subr.mxu0 0.0
        %1078 = vmatpush1.msra.mxu0 %v945
        %1079 = vmatprep.subr.mxu0 0.0
        %1080 = vmatpush1.msra.mxu0 %v948
        %1081 = vmatprep.subr.mxu0 0.0
        %1082 = vmatpush1.msra.mxu0 %v951
        %1083 = vmatprep.subr.mxu0 0.0
        %1084 = vmatpush1.msra.mxu0 %v954
        %1085 = vmatprep.subr.mxu0 0.0
        %1086 = vmatpush1.msra.mxu0 %v957
        %1087 = vmatprep.subr.mxu0 0.0
        %1088 = vmatpush1.msra.mxu0 %v960
        %1089 = vmatprep.subr.mxu0 0.0
        %1090 = vmatpush1.msra.mxu0 0.0
        %1091 = vmatprep.subr.mxu0 0.0
        %1092 = vmatpush1.msra.mxu0 0.0
        %1093 = vmatprep.subr.mxu0 0.0
        %1094 = vmatpush1.msra.mxu0 0.0
        %1095 = vmatprep.subr.mxu0 0.0
        %1096 = vmatpush1.msra.mxu0 0.0
        %1097 = vmatprep.subr.mxu0 0.0
        %1098 = vmatpush1.msra.mxu0 0.0
        %1099 = vmatprep.subr.mxu0 0.0
        %1100 = vmatpush1.msra.mxu0 0.0
        %1101 = vmatprep.subr.mxu0 0.0
        %1102 = vmatpush1.msra.mxu0 0.0
        %1103 = vmatprep.subr.mxu0 0.0
        %1104 = vmatpush1.msra.mxu0 0.0
        %1105 = vmatprep.subr.mxu0 0.0
        %1106 = vmatpush1.msra.mxu0 0.0
        %1107 = vmatprep.subr.mxu0 0.0
        %1108 = vmatpush1.msra.mxu0 0.0
        %1109 = vmatprep.subr.mxu0 0.0
        %1110 = vmatpush1.msra.mxu0 0.0
        %1111 = vmatprep.subr.mxu0 0.0
        %1112 = vmatpush1.msra.mxu0 0.0
        %1113 = vmatprep.subr.mxu0 0.0
        %1114 = vmatpush1.msra.mxu0 0.0
        %1115 = vmatprep.subr.mxu0 0.0
        %1116 = vmatpush1.msra.mxu0 0.0
        %1117 = vmatprep.subr.mxu0 0.0
        %1118 = vmatpush1.msra.mxu0 0.0
        %1119 = vmatprep.subr.mxu0 0.0
        %1120 = vmatpush1.msra.mxu0 0.0
        %1121 = vmatprep.subr.mxu0 0.0
        %1122 = vmatpush1.msra.mxu0 0.0
        %1123 = vmatprep.subr.mxu0 0.0
        %1124 = vmatpush1.msra.mxu0 0.0
        %1125 = vmatprep.subr.mxu0 0.0
        %1126 = vmatpush1.msra.mxu0 0.0
        %1127 = vmatprep.subr.mxu0 0.0
        %1128 = vmatpush1.msra.mxu0 0.0
        %1129 = vmatprep.subr.mxu0 0.0
        %1130 = vmatpush1.msra.mxu0 0.0
        %1131 = vmatprep.subr.mxu0 0.0
        %1132 = vmatpush1.msra.mxu0 0.0
        %1133 = vmatprep.subr.mxu0 0.0
        %1134 = vmatpush1.msra.mxu0 0.0
        %1135 = vmatprep.mubr.f32.mxu0 0.0
        %1136 = vmatmul.mubr.f32.gmra.mrb[0].mxu0 %v989
        %v1137 = vpop.f32.mrb[0].mxu0
        %v1138 = vadd.f32 0.0, %v1137
        %v1139 = vpop.f32.mrb[0].mxu0
        %1140 = vmatprep.mubr.f32.mxu0 0.0
        %1141 = vmatmul.mubr.f32.gmra.mrb[0].mxu0 %v992
        %v1142 = vpop.f32.mrb[0].mxu0
        %v1143 = vadd.f32 0.0, %v1142
        %v1144 = vpop.f32.mrb[0].mxu0
        %1145 = vdwg.mxu0
        %v1146 = vadd.f32 %v764, %v1061
        %v1147 = vadd.f32 %v766, %v1063
        %v1148 = vadd.f32 %v847, %v1138
        %v1149 = vadd.f32 %v770, %v1067
        %v1150 = vadd.f32 %v772, %v1069
        %v1151 = vadd.f32 %v852, %v1143
        %v1152 = vld [vmem:[%s5] sm:$0xff]
        %v1153 = vld [vmem:[%s5 + $0x8] sm:$0xff]
        %1155 = vset.pattern.permute.xlu0 0
        %1156 = vperm.xlu0 %1155, %v1152
        %v1157 = vpop.permute.xlu0 %1156
        %1160 = vset.pattern.permute.xlu0 0
        %1161 = vperm.xlu0 %1160, %v1153
        %v1162 = vpop.permute.xlu0 %1161
        %v1164 = vadd.f32 %v1146, %v1157
        %v1165 = vadd.f32 %v1147, %v1157
        %v1166 = vadd.f32 %v1148, %v1157
        %v1167 = vadd.f32 %v1149, %v1162
        %v1168 = vadd.f32 %v1150, %v1162
        %v1169 = vadd.f32 %v1151, %v1162
        %v1170 = vmul.f32 %v1164, 0.5
        %v1171 = vmul.f32 %v1165, 0.5
        %v1172 = vmul.f32 %v1166, 0.5
        %v1173 = vmul.f32 %v1167, 0.5
        %v1174 = vmul.f32 %v1168, 0.5
        %v1175 = vmul.f32 %v1169, 0.5
        %v1176 = vtanh.pop %v1170
        %v1177 = vtanh.pop %v1171
        %v1178 = vtanh.pop %v1172
        %v1179 = vtanh.pop %v1173
        %v1180 = vtanh.pop %v1174
        %v1181 = vtanh.pop %v1175
        %v1182 = vadd.f32 %v1176, 1.0
        %v1183 = vadd.f32 %v1177, 1.0
        %v1184 = vadd.f32 %v1178, 1.0
        %v1185 = vadd.f32 %v1179, 1.0
        %v1186 = vadd.f32 %v1180, 1.0
        %v1187 = vadd.f32 %v1181, 1.0
        %v1188 = vmul.f32 %v1182, 0.5
        %v1189 = vmul.f32 %v1183, 0.5
        %v1190 = vmul.f32 %v1184, 0.5
        %v1191 = vmul.f32 %v1185, 0.5
        %v1192 = vmul.f32 %v1186, 0.5
        %v1193 = vmul.f32 %v1187, 0.5
        %1194 = vst [vmem:[#allocation2] sm:$0xff] 0.0
        %1195 = vst [vmem:[#allocation2 + $0x20] sm:$0xff] 0.0
        %v1196 = vmul.f32 %v457, %v1191
        %v1197 = vmul.f32 %v458, %v1192
        %v1198 = vmul.f32 %v459, %v1193
        %1199 = vst [vmem:[#allocation2 + $0x8] sm:$0xff] %v1196
        %1200 = vst [vmem:[#allocation2 + $0x10] sm:$0xff] %v1197
        %1201 = vst [vmem:[#allocation2 + $0x18] sm:$0xff] %v1198
        %v1202 = vld [vmem:[#allocation2] sm:$0xff]
        %v1203 = vld [vmem:[#allocation2 + $0x8] sm:$0xff]
        %v1204 = vld [vmem:[#allocation2 + $0x10] sm:$0xff]
        %v1205 = vld [vmem:[#allocation2 + $0x18] sm:$0xff]
        %v1206 = vld [vmem:[#allocation2 + $0x8] sm:$0xff]
        %v1207 = vld [vmem:[#allocation2 + $0x10] sm:$0xff]
        %v1208 = vld [vmem:[#allocation2 + $0x18] sm:$0xff]
        %v1209 = vld [vmem:[#allocation2 + $0x20] sm:$0xff]
        %1214 = vrot.lane.b32.xlu0 %v1202, 127
        %v1215 = vpop.permute.xlu0 %1214
        %1216 = vrot.lane.b32.xlu0 %v1203, 127
        %v1217 = vpop.permute.xlu0 %1216
        %1218 = vrot.lane.b32.xlu0 %v1204, 127
        %v1219 = vpop.permute.xlu0 %1218
        %1220 = vrot.lane.b32.xlu0 %v1205, 127
        %v1221 = vpop.permute.xlu0 %1220
        %v1222 = vsel %vm367, %v1215, %v1217
        %v1223 = vsel %vm367, %v1217, %v1219
        %v1224 = vsel %vm367, %v1219, %v1221
        %1225 = vrot.lane.b32.xlu0 %v1202, 126
        %v1226 = vpop.permute.xlu0 %1225
        %1227 = vrot.lane.b32.xlu0 %v1203, 126
        %v1228 = vpop.permute.xlu0 %1227
        %1229 = vrot.lane.b32.xlu0 %v1204, 126
        %v1230 = vpop.permute.xlu0 %1229
        %1231 = vrot.lane.b32.xlu0 %v1205, 126
        %v1232 = vpop.permute.xlu0 %1231
        %v1233 = vsel %vm379, %v1226, %v1228
        %v1234 = vsel %vm379, %v1228, %v1230
        %v1235 = vsel %vm379, %v1230, %v1232
        %1236 = vrot.lane.b32.xlu0 %v1202, 110
        %v1237 = vpop.permute.xlu0 %1236
        %1238 = vrot.lane.b32.xlu0 %v1203, 110
        %v1239 = vpop.permute.xlu0 %1238
        %1240 = vrot.lane.b32.xlu0 %v1204, 110
        %v1241 = vpop.permute.xlu0 %1240
        %1242 = vrot.lane.b32.xlu0 %v1205, 110
        %v1243 = vpop.permute.xlu0 %1242
        %v1244 = vsel %vm391, %v1237, %v1239
        %v1245 = vsel %vm391, %v1239, %v1241
        %v1246 = vsel %vm391, %v1241, %v1243
        %1247 = vrot.lane.b32.xlu0 %v1203, 109
        %v1248 = vpop.permute.xlu0 %1247
        %1249 = vrot.lane.b32.xlu0 %v1204, 109
        %v1250 = vpop.permute.xlu0 %1249
        %1251 = vrot.lane.b32.xlu0 %v1205, 109
        %v1252 = vpop.permute.xlu0 %1251
        %v1253 = vsel %vm401, %v1248, %v1250
        %v1254 = vsel %vm401, %v1250, %v1252
        %1259 = vrot.lane.b32.xlu0 %v1206, 108
        %v1260 = vpop.permute.xlu0 %1259
        %1261 = vrot.lane.b32.xlu0 %v1207, 108
        %v1262 = vpop.permute.xlu0 %1261
        %1263 = vrot.lane.b32.xlu0 %v1208, 108
        %v1264 = vpop.permute.xlu0 %1263
        %1265 = vrot.lane.b32.xlu0 %v1209, 108
        %v1266 = vpop.permute.xlu0 %1265
        %v1267 = vsel %vm416, %v1260, %v1262
        %v1268 = vsel %vm416, %v1262, %v1264
        %v1269 = vsel %vm416, %v1264, %v1266
        %1270 = vrot.lane.b32.xlu0 %v1206, 92
        %v1271 = vpop.permute.xlu0 %1270
        %1272 = vrot.lane.b32.xlu0 %v1207, 92
        %v1273 = vpop.permute.xlu0 %1272
        %1274 = vrot.lane.b32.xlu0 %v1208, 92
        %v1275 = vpop.permute.xlu0 %1274
        %1276 = vrot.lane.b32.xlu0 %v1209, 92
        %v1277 = vpop.permute.xlu0 %1276
        %v1278 = vsel %vm428, %v1271, %v1273
        %v1279 = vsel %vm428, %v1273, %v1275
        %v1280 = vsel %vm428, %v1275, %v1277
        %1281 = vrot.lane.b32.xlu0 %v1206, 91
        %v1282 = vpop.permute.xlu0 %1281
        %1283 = vrot.lane.b32.xlu0 %v1207, 91
        %v1284 = vpop.permute.xlu0 %1283
        %1285 = vrot.lane.b32.xlu0 %v1208, 91
        %v1286 = vpop.permute.xlu0 %1285
        %1287 = vrot.lane.b32.xlu0 %v1209, 91
        %v1288 = vpop.permute.xlu0 %1287
        %v1289 = vsel %vm440, %v1282, %v1284
        %v1290 = vsel %vm440, %v1284, %v1286
        %v1291 = vsel %vm440, %v1286, %v1288
        %1292 = vrot.lane.b32.xlu0 %v1206, 90
        %v1293 = vpop.permute.xlu0 %1292
        %1294 = vrot.lane.b32.xlu0 %v1207, 90
        %v1295 = vpop.permute.xlu0 %1294
        %1296 = vrot.lane.b32.xlu0 %v1208, 90
        %v1297 = vpop.permute.xlu0 %1296
        %1298 = vrot.lane.b32.xlu0 %v1209, 90
        %v1299 = vpop.permute.xlu0 %1298
        %v1300 = vsel %vm452, %v1293, %v1295
        %v1301 = vsel %vm452, %v1295, %v1297
        %v1302 = vsel %vm452, %v1297, %v1299
        %v1303 = vld [vmem:[%s4] sm:$0xff]
        %1304 = vrot.lane.b32.xlu0 %v1202, 19
        %v1305 = vpop.permute.xlu0 %1304
        %1306 = vrot.lane.b32.xlu0 %v1203, 19
        %v1307 = vpop.permute.xlu0 %1306
        %1308 = vrot.lane.b32.xlu0 %v1204, 19
        %v1309 = vpop.permute.xlu0 %1308
        %1310 = vrot.lane.b32.xlu0 %v1205, 19
        %v1311 = vpop.permute.xlu0 %1310
        %1312 = vrot.lane.b32.xlu0 %v1222, 19
        %v1313 = vpop.permute.xlu0 %1312
        %1314 = vrot.lane.b32.xlu0 %v1223, 19
        %v1315 = vpop.permute.xlu0 %1314
        %1316 = vrot.lane.b32.xlu0 %v1224, 19
        %v1317 = vpop.permute.xlu0 %1316
        %1318 = vrot.lane.b32.xlu0 %v1221, 19
        %v1319 = vpop.permute.xlu0 %1318
        %1320 = vrot.lane.b32.xlu0 %v1233, 19
        %v1321 = vpop.permute.xlu0 %1320
        %1322 = vrot.lane.b32.xlu0 %v1234, 19
        %v1323 = vpop.permute.xlu0 %1322
        %1324 = vrot.lane.b32.xlu0 %v1235, 19
        %v1325 = vpop.permute.xlu0 %1324
        %1326 = vrot.lane.b32.xlu0 %v1232, 19
        %v1327 = vpop.permute.xlu0 %1326
        %1328 = vrot.lane.b32.xlu0 %v1244, 19
        %v1329 = vpop.permute.xlu0 %1328
        %1330 = vrot.lane.b32.xlu0 %v1245, 19
        %v1331 = vpop.permute.xlu0 %1330
        %1332 = vrot.lane.b32.xlu0 %v1246, 19
        %v1333 = vpop.permute.xlu0 %1332
        %1334 = vrot.lane.b32.xlu0 %v1243, 19
        %v1335 = vpop.permute.xlu0 %1334
        %1336 = vrot.lane.b32.xlu0 %v1248, 19
        %v1337 = vpop.permute.xlu0 %1336
        %1338 = vrot.lane.b32.xlu0 %v1253, 19
        %v1339 = vpop.permute.xlu0 %1338
        %1340 = vrot.lane.b32.xlu0 %v1254, 19
        %v1341 = vpop.permute.xlu0 %1340
        %1342 = vrot.lane.b32.xlu0 %v1252, 19
        %v1343 = vpop.permute.xlu0 %1342
        %1344 = vrot.lane.b32.xlu0 %v1260, 19
        %v1345 = vpop.permute.xlu0 %1344
        %1346 = vrot.lane.b32.xlu0 %v1267, 19
        %v1347 = vpop.permute.xlu0 %1346
        %1348 = vrot.lane.b32.xlu0 %v1268, 19
        %v1349 = vpop.permute.xlu0 %1348
        %1350 = vrot.lane.b32.xlu0 %v1269, 19
        %v1351 = vpop.permute.xlu0 %1350
        %1352 = vrot.lane.b32.xlu0 %v1271, 19
        %v1353 = vpop.permute.xlu0 %1352
        %1354 = vrot.lane.b32.xlu0 %v1278, 19
        %v1355 = vpop.permute.xlu0 %1354
        %1356 = vrot.lane.b32.xlu0 %v1279, 19
        %v1357 = vpop.permute.xlu0 %1356
        %1358 = vrot.lane.b32.xlu0 %v1280, 19
        %v1359 = vpop.permute.xlu0 %1358
        %1360 = vrot.lane.b32.xlu0 %v1282, 19
        %v1361 = vpop.permute.xlu0 %1360
        %1362 = vrot.lane.b32.xlu0 %v1289, 19
        %v1363 = vpop.permute.xlu0 %1362
        %1364 = vrot.lane.b32.xlu0 %v1290, 19
        %v1365 = vpop.permute.xlu0 %1364
        %1366 = vrot.lane.b32.xlu0 %v1291, 19
        %v1367 = vpop.permute.xlu0 %1366
        %1368 = vrot.lane.b32.xlu0 %v1293, 19
        %v1369 = vpop.permute.xlu0 %1368
        %1370 = vrot.lane.b32.xlu0 %v1300, 19
        %v1371 = vpop.permute.xlu0 %1370
        %1372 = vrot.lane.b32.xlu0 %v1301, 19
        %v1373 = vpop.permute.xlu0 %1372
        %1374 = vrot.lane.b32.xlu0 %v1302, 19
        %v1375 = vpop.permute.xlu0 %1374
        %v1376 = vsel %vm632, %v1305, %v1307
        %v1377 = vsel %vm632, %v1307, %v1309
        %v1378 = vsel %vm632, %v1309, %v1311
        %v1379 = vsel %vm632, %v1313, %v1315
        %v1380 = vsel %vm632, %v1315, %v1317
        %v1381 = vsel %vm632, %v1317, %v1319
        %v1382 = vsel %vm632, %v1321, %v1323
        %v1383 = vsel %vm632, %v1323, %v1325
        %v1384 = vsel %vm632, %v1325, %v1327
        %v1385 = vsel %vm632, %v1329, %v1331
        %v1386 = vsel %vm632, %v1331, %v1333
        %v1387 = vsel %vm632, %v1333, %v1335
        %v1388 = vsel %vm632, %v1337, %v1339
        %v1389 = vsel %vm632, %v1339, %v1341
        %v1390 = vsel %vm632, %v1341, %v1343
        %v1391 = vsel %vm632, %v1345, %v1347
        %v1392 = vsel %vm632, %v1347, %v1349
        %v1393 = vsel %vm632, %v1349, %v1351
        %v1394 = vsel %vm632, %v1353, %v1355
        %v1395 = vsel %vm632, %v1355, %v1357
        %v1396 = vsel %vm632, %v1357, %v1359
        %v1397 = vsel %vm632, %v1361, %v1363
        %v1398 = vsel %vm632, %v1363, %v1365
        %v1399 = vsel %vm632, %v1365, %v1367
        %v1400 = vsel %vm632, %v1369, %v1371
        %v1401 = vsel %vm632, %v1371, %v1373
        %v1402 = vsel %vm632, %v1373, %v1375
        %v1431 = vsel %vm687, %v1303, 0
        %1433 = vmatprep.subr.mxu0 %v1377
        %1434 = vmatpush1.msra.mxu0 %v1376
        %1435 = vmatprep.subr.mxu0 %v1380
        %1436 = vmatpush1.msra.mxu0 %v1379
        %1437 = vmatprep.subr.mxu0 %v1383
        %1438 = vmatpush1.msra.mxu0 %v1382
        %1439 = vmatprep.subr.mxu0 %v1386
        %1440 = vmatpush1.msra.mxu0 %v1385
        %1441 = vmatprep.subr.mxu0 %v1389
        %1442 = vmatpush1.msra.mxu0 %v1388
        %1443 = vmatprep.subr.mxu0 %v1392
        %1444 = vmatpush1.msra.mxu0 %v1391
        %1445 = vmatprep.subr.mxu0 %v1395
        %1446 = vmatpush1.msra.mxu0 %v1394
        %1447 = vmatprep.subr.mxu0 %v1398
        %1448 = vmatpush1.msra.mxu0 %v1397
        %1449 = vmatprep.subr.mxu0 %v1401
        %1450 = vmatpush1.msra.mxu0 %v1400
        %1451 = vmatprep.subr.mxu0 0.0
        %1452 = vmatpush1.msra.mxu0 0.0
        %1453 = vmatprep.subr.mxu0 0.0
        %1454 = vmatpush1.msra.mxu0 0.0
        %1455 = vmatprep.subr.mxu0 0.0
        %1456 = vmatpush1.msra.mxu0 0.0
        %1457 = vmatprep.subr.mxu0 0.0
        %1458 = vmatpush1.msra.mxu0 0.0
        %1459 = vmatprep.subr.mxu0 0.0
        %1460 = vmatpush1.msra.mxu0 0.0
        %1461 = vmatprep.subr.mxu0 0.0
        %1462 = vmatpush1.msra.mxu0 0.0
        %1463 = vmatprep.subr.mxu0 0.0
        %1464 = vmatpush1.msra.mxu0 0.0
        %1465 = vmatprep.subr.mxu0 0.0
        %1466 = vmatpush1.msra.mxu0 0.0
        %1467 = vmatprep.subr.mxu0 0.0
        %1468 = vmatpush1.msra.mxu0 0.0
        %1469 = vmatprep.subr.mxu0 0.0
        %1470 = vmatpush1.msra.mxu0 0.0
        %1471 = vmatprep.subr.mxu0 0.0
        %1472 = vmatpush1.msra.mxu0 0.0
        %1473 = vmatprep.subr.mxu0 0.0
        %1474 = vmatpush1.msra.mxu0 0.0
        %1475 = vmatprep.subr.mxu0 0.0
        %1476 = vmatpush1.msra.mxu0 0.0
        %1477 = vmatprep.subr.mxu0 0.0
        %1478 = vmatpush1.msra.mxu0 0.0
        %1479 = vmatprep.subr.mxu0 0.0
        %1480 = vmatpush1.msra.mxu0 0.0
        %1481 = vmatprep.subr.mxu0 0.0
        %1482 = vmatpush1.msra.mxu0 0.0
        %1483 = vmatprep.subr.mxu0 0.0
        %1484 = vmatpush1.msra.mxu0 0.0
        %1485 = vmatprep.subr.mxu0 0.0
        %1486 = vmatpush1.msra.mxu0 0.0
        %1487 = vmatprep.subr.mxu0 0.0
        %1488 = vmatpush1.msra.mxu0 0.0
        %1489 = vmatprep.subr.mxu0 0.0
        %1490 = vmatpush1.msra.mxu0 0.0
        %1491 = vmatprep.subr.mxu0 0.0
        %1492 = vmatpush1.msra.mxu0 0.0
        %1493 = vmatprep.subr.mxu0 0.0
        %1494 = vmatpush1.msra.mxu0 0.0
        %1495 = vmatprep.subr.mxu0 0.0
        %1496 = vmatpush1.msra.mxu0 0.0
        %1497 = vmatprep.mubr.f32.mxu0 0.0
        %1498 = vmatmul.mubr.f32.gmra.mrb[0].mxu0 %v1431
        %v1499 = vpop.f32.mrb[0].mxu0
        %v1500 = vadd.f32 0.0, %v1499
        %v1501 = vpop.f32.mrb[0].mxu0
        %v1502 = vadd.f32 0.0, %v1501
        %1503 = vdwg.mxu0
        %1504 = vmatprep.subr.mxu0 0.0
        %1505 = vmatpush1.msra.mxu0 %v1378
        %1506 = vmatprep.subr.mxu0 0.0
        %1507 = vmatpush1.msra.mxu0 %v1381
        %1508 = vmatprep.subr.mxu0 0.0
        %1509 = vmatpush1.msra.mxu0 %v1384
        %1510 = vmatprep.subr.mxu0 0.0
        %1511 = vmatpush1.msra.mxu0 %v1387
        %1512 = vmatprep.subr.mxu0 0.0
        %1513 = vmatpush1.msra.mxu0 %v1390
        %1514 = vmatprep.subr.mxu0 0.0
        %1515 = vmatpush1.msra.mxu0 %v1393
        %1516 = vmatprep.subr.mxu0 0.0
        %1517 = vmatpush1.msra.mxu0 %v1396
        %1518 = vmatprep.subr.mxu0 0.0
        %1519 = vmatpush1.msra.mxu0 %v1399
        %1520 = vmatprep.subr.mxu0 0.0
        %1521 = vmatpush1.msra.mxu0 %v1402
        %1522 = vmatprep.subr.mxu0 0.0
        %1523 = vmatpush1.msra.mxu0 0.0
        %1524 = vmatprep.subr.mxu0 0.0
        %1525 = vmatpush1.msra.mxu0 0.0
        %1526 = vmatprep.subr.mxu0 0.0
        %1527 = vmatpush1.msra.mxu0 0.0
        %1528 = vmatprep.subr.mxu0 0.0
        %1529 = vmatpush1.msra.mxu0 0.0
        %1530 = vmatprep.subr.mxu0 0.0
        %1531 = vmatpush1.msra.mxu0 0.0
        %1532 = vmatprep.subr.mxu0 0.0
        %1533 = vmatpush1.msra.mxu0 0.0
        %1534 = vmatprep.subr.mxu0 0.0
        %1535 = vmatpush1.msra.mxu0 0.0
        %1536 = vmatprep.subr.mxu0 0.0
        %1537 = vmatpush1.msra.mxu0 0.0
        %1538 = vmatprep.subr.mxu0 0.0
        %1539 = vmatpush1.msra.mxu0 0.0
        %1540 = vmatprep.subr.mxu0 0.0
        %1541 = vmatpush1.msra.mxu0 0.0
        %1542 = vmatprep.subr.mxu0 0.0
        %1543 = vmatpush1.msra.mxu0 0.0
        %1544 = vmatprep.subr.mxu0 0.0
        %1545 = vmatpush1.msra.mxu0 0.0
        %1546 = vmatprep.subr.mxu0 0.0
        %1547 = vmatpush1.msra.mxu0 0.0
        %1548 = vmatprep.subr.mxu0 0.0
        %1549 = vmatpush1.msra.mxu0 0.0
        %1550 = vmatprep.subr.mxu0 0.0
        %1551 = vmatpush1.msra.mxu0 0.0
        %1552 = vmatprep.subr.mxu0 0.0
        %1553 = vmatpush1.msra.mxu0 0.0
        %1554 = vmatprep.subr.mxu0 0.0
        %1555 = vmatpush1.msra.mxu0 0.0
        %1556 = vmatprep.subr.mxu0 0.0
        %1557 = vmatpush1.msra.mxu0 0.0
        %1558 = vmatprep.subr.mxu0 0.0
        %1559 = vmatpush1.msra.mxu0 0.0
        %1560 = vmatprep.subr.mxu0 0.0
        %1561 = vmatpush1.msra.mxu0 0.0
        %1562 = vmatprep.subr.mxu0 0.0
        %1563 = vmatpush1.msra.mxu0 0.0
        %1564 = vmatprep.subr.mxu0 0.0
        %1565 = vmatpush1.msra.mxu0 0.0
        %1566 = vmatprep.subr.mxu0 0.0
        %1567 = vmatpush1.msra.mxu0 0.0
        %1568 = vmatprep.mubr.f32.mxu0 0.0
        %1569 = vmatmul.mubr.f32.gmra.mrb[0].mxu0 %v1431
        %v1570 = vpop.f32.mrb[0].mxu0
        %v1571 = vadd.f32 0.0, %v1570
        %v1572 = vpop.f32.mrb[0].mxu0
        %1573 = vdwg.mxu0
        %v1574 = vadd.f32 %v776, %v1500
        %v1575 = vadd.f32 %v778, %v1502
        %v1576 = vadd.f32 %v857, %v1571
        %v1577 = vld [vmem:[%s6] sm:$0xff]
        %1579 = vset.pattern.permute.xlu0 0
        %1580 = vperm.xlu0 %1579, %v1577
        %v1581 = vpop.permute.xlu0 %1580
        %v1583 = vadd.f32 %v1574, %v1581
        %v1584 = vadd.f32 %v1575, %v1581
        %v1585 = vadd.f32 %v1576, %v1581
        %v1586 = vtanh.pop %v1583
        %v1587 = vtanh.pop %v1584
        %v1588 = vtanh.pop %v1585
        %v1589 = vsub.f32 %v1586, %v457
        %v1590 = vsub.f32 %v1587, %v458
        %v1591 = vsub.f32 %v1588, %v459
        %v1592 = vmul.f32 %v1188, %v1589
        %v1593 = vmul.f32 %v1189, %v1590
        %v1594 = vmul.f32 %v1190, %v1591
        %v1595 = vadd.f32 %v457, %v1592
        %v1596 = vadd.f32 %v458, %v1593
        %v1597 = vadd.f32 %v459, %v1594
        %1598 = vst [vmem:[%s346] sm:$0xff] %v1595
        %1599 = vst [vmem:[%s346 + $0x8] sm:$0xff] %v1596
        %1600 = vst [vmem:[%s346 + $0x10] sm:$0xff] %v1597
        %s1601 = sand.u32 %s192, 1
        %s1602 = scalar_lea.sflag [#allocation5], %s1601
        %s1603 = sand.u32 %s192, 1
        %s1604 = smul.addr %s1603, 24
        %s1605 = scalar_lea.vmem [#allocation9], %s1604
        // Predicated region
        $region61: #{tpu_custom_call.1} parent=47 // pred_check
          %p1606 = pneg %p202
        $region62: #{tpu_custom_call.1} parent=47 // pred_check_branch
          %1608 = sbr.rel (%p1606) target = $region64
        $region63: #{tpu_custom_call.1} parent=47 // pred_region
          %s1610 = ssub.s32 384, 384
          %1611 = vsyncadd %s1602, %s1610
          %s1612 = smul.addr %s27, 3
          %s1613 = smul.addr %s1612, 128
          %s1614 = scalar_lea.hbm %s7, %s1613
          %s1616 = sshll.u32 %s1605, 4
          %s1617 = int_to_ptr.vmem [resolvable:$true] %s1616
          %1619 = dma.vmem_to_hbm [thread:$0]  %s1617, 384, %s1614, %s1602
        $region64: #{tpu_custom_call.1} parent=47 // pred_fallthru
          _
      $region48: #{tpu_custom_call.1} parent=5 // pred_fallthru
        _
      %p1620 = scmp.le.s32.totalorder 2, %s22
      // Predicated region
      $region65: #{tpu_custom_call.1} parent=5 // pred_check
        %p1621 = pneg %p1620
      $region66: #{tpu_custom_call.1} parent=5 // pred_check_branch
        %1623 = sbr.rel (%p1621) target = $region68
      $region67: #{tpu_custom_call.1} parent=5 // pred_region
        %s1624 = ssub.s32 %s22, 2
        // Predicated region
        $region69: #{tpu_custom_call.1} parent=67 // pred_check
          %p1625 = pneg %p208
        $region70: #{tpu_custom_call.1} parent=67 // pred_check_branch
          %1627 = sbr.rel (%p1625) target = $region72
        $region71: #{tpu_custom_call.1} parent=67 // pred_region
          %s1628 = sand.u32 %s193, 1
          %s1629 = scalar_lea.sflag [#allocation5], %s1628
          %s1630 = sand.u32 %s193, 1
          %s1631 = smul.addr %s1630, 24
          %s1632 = scalar_lea.vmem [#allocation9], %s1631
          %1633 = dma.done %s1629, 384
        $region72: #{tpu_custom_call.1} parent=67 // pred_fallthru
          _
      $region68: #{tpu_custom_call.1} parent=5 // pred_fallthru
        _
    $region6: #{tpu_custom_call.1} parent=1 // loop_footer
      %s26 = sadd.s32 1, %s22
    $region7: #{tpu_custom_call.1} parent=1 // loop_footer_branch
      %21 = sbr.rel target = $region3
    $region8: #{tpu_custom_call.1} parent=1 // loop_exit
      _
    %1634 = vsyncpa [#allocation4], 1
    %s1635 = scalar_lea.sflag [#allocation4], 1
    %1636 = vsyncpa %s1635, 1
    %1637 = vsyncpa [#allocation7], 1
    %s1638 = scalar_lea.sflag [#allocation7], 1
    %1639 = vsyncpa %s1638, 1
    %1640 = vsyncpa [#allocation5], 1
    %s1641 = scalar_lea.sflag [#allocation5], 1
    %1642 = vsyncpa %s1641, 1

</llo_original>
